<compile_context>
chip_gen: v7x
topology: tpu7x:2x2x1
jax: 0.10.0
libtpu: 0.0.40
codegen_flags: <defaults>
</compile_context>

<pallas_src>
import functools

import jax
import jax.numpy as jnp
from jax.experimental import pallas as pl
from jax.experimental.pallas import tpu as pltpu

EPS = 1e-5
_VMEM_LIMIT = 32 * 1024 * 1024  # fits default scoped VMEM on v5e/v6e/v7x


def _round_up(x, m):
    return (x + m - 1) // m * m


# ---------------------------------------------------------------------------
# Pass 1: per-M-tile GEMM + per-channel sum / sum-of-squares accumulation.
# On the last tile the sums are folded into the BN affine:
#   scale = gamma * rsqrt(var + eps),  shift = beta - mean * scale
# so pass 2 is a single FMA per element.
# ---------------------------------------------------------------------------
def _stats_kernel(patches_ref, w_ref, gamma_ref, beta_ref, affine_ref, *, inv_m):
    i = pl.program_id(0)

    @pl.when(i == 0)
    def _():
        affine_ref[...] = jnp.zeros_like(affine_ref)

    # (tile_m, Kd) @ (Kd, C) -> f32 accumulation on the MXU (bf16 operands).
    y = jnp.dot(patches_ref[...], w_ref[...], preferred_element_type=jnp.float32)
    contrib = jnp.concatenate(
        [jnp.sum(y, axis=0, keepdims=True),
         jnp.sum(y * y, axis=0, keepdims=True)],
        axis=0)                                           # (2, C)
    affine_ref[...] += contrib

    @pl.when(i == pl.num_programs(0) - 1)
    def _():
        s = affine_ref[...]                               # row 0: sum, row 1: sumsq
        mean = s[0:1, :] * inv_m
        var = s[1:2, :] * inv_m - mean * mean             # biased var (training BN)
        scale = gamma_ref[...] * jax.lax.rsqrt(var + EPS)
        shift = beta_ref[...] - mean * scale
        affine_ref[...] = jnp.concatenate([scale, shift], axis=0)


# ---------------------------------------------------------------------------
# Pass 2: recompute the per-M-tile GEMM and apply folded BN affine + ReLU.
# ---------------------------------------------------------------------------
def _norm_kernel(patches_ref, w_ref, affine_ref, o_ref):
    y = jnp.dot(patches_ref[...], w_ref[...], preferred_element_type=jnp.float32)
    scale = affine_ref[0:1, :]
    shift = affine_ref[1:2, :]
    o_ref[...] = jnp.maximum(y * scale + shift, 0.0).astype(o_ref.dtype)


def _im2col(x_nhwc, k, stride, padding):
    """x_nhwc: (N, H, W, C) -> patches (N*Ho*Wo, k*k*C), plus (Ho, Wo)."""
    x = jnp.pad(x_nhwc, ((0, 0), (padding, padding), (padding, padding), (0, 0)))
    n, hp, wp, c = x.shape
    ho = (hp - k) // stride + 1
    wo = (wp - k) // stride + 1
    cols = []
    for di in range(k):
        for dj in range(k):
            cols.append(
                x[:, di:di + ho * stride:stride, dj:dj + wo * stride:stride, :])
    patches = jnp.stack(cols, axis=3)                     # (N, Ho, Wo, k*k, C)
    return patches.reshape(n * ho * wo, k * k * c), ho, wo


def _conv_bn_relu_layer(x_nhwc, weight, gamma, beta, *, k, stride, padding,
                        out_dtype):
    """conv(k, stride, padding) + training-mode BN + ReLU, two-pass Pallas."""
    n = x_nhwc.shape[0]
    cout = weight.shape[0]
    # PyTorch (Cout, Cin, Kh, Kw) -> (Kh*Kw*Cin, Cout), matching im2col's
    # (di, dj, cin) tap ordering.
    w_mat = (jnp.transpose(weight, (2, 3, 1, 0))
             .reshape(-1, cout).astype(jnp.bfloat16))

    # bf16 activations: halves HBM traffic for the (expanded) patches matrix
    # and uses the MXU's native bf16 path; accumulation stays f32.
    patches, ho, wo = _im2col(x_nhwc.astype(jnp.bfloat16), k, stride, padding)
    m, kd = patches.shape

    # M tiling: multiple of 8 sublanes; 512-row cap keeps the double-buffered
    # working set tiny even under v7x's 64 MiB physical VMEM.
    tile_m = min(512, _round_up(m, 8))
    m_pad = _round_up(m, tile_m)
    if m_pad != m:
        # Zero rows are harmless: bias is dropped, so padded rows give y == 0
        # and contribute nothing to the sums; their pass-2 rows are sliced off.
        patches = jnp.pad(patches, ((0, m_pad - m), (0, 0)))
    n_tiles = m_pad // tile_m

    gamma2 = gamma.reshape(1, cout).astype(jnp.float32)
    beta2 = beta.reshape(1, cout).astype(jnp.float32)

    patches_spec = pl.BlockSpec((tile_m, kd), lambda i: (i, 0))
    w_spec = pl.BlockSpec((kd, cout), lambda i: (0, 0))
    vec_spec = pl.BlockSpec((1, cout), lambda i: (0, 0))
    aff_spec = pl.BlockSpec((2, cout), lambda i: (0, 0))

    # Pass 1: accumulate stats (output-resident accumulator over the M axis).
    affine = pl.pallas_call(
        functools.partial(_stats_kernel, inv_m=1.0 / m),
        out_shape=jax.ShapeDtypeStruct((2, cout), jnp.float32),
        grid=(n_tiles,),
        in_specs=[patches_spec, w_spec, vec_spec, vec_spec],
        out_specs=aff_spec,
        compiler_params=pltpu.CompilerParams(
            dimension_semantics=("arbitrary",),
            vmem_limit_bytes=_VMEM_LIMIT),
    )(patches, w_mat, gamma2, beta2)

    # Pass 2: normalize + ReLU per M-tile (independent tiles -> "parallel").
    out = pl.pallas_call(
        _norm_kernel,
        out_shape=jax.ShapeDtypeStruct((m_pad, cout), out_dtype),
        grid=(n_tiles,),
        in_specs=[patches_spec, w_spec, aff_spec],
        out_specs=pl.BlockSpec((tile_m, cout), lambda i: (i, 0)),
        compiler_params=pltpu.CompilerParams(
            dimension_semantics=("parallel",),
            vmem_limit_bytes=_VMEM_LIMIT),
    )(patches, w_mat, affine)

    return out[:m].reshape(n, ho, wo, cout)


class CAEDownBlockPallas:
    """JAX/Pallas port of CAEDownBlock (forward only, training-mode BN)."""

    def __init__(self, in_channels, out_channels, kernel_size, stride, padding,
                 key=None):
        self.in_channels = in_channels
        self.out_channels = out_channels
        self.kernel_size = kernel_size
        self.stride = stride
        self.padding = padding  # NOTE: ignored by conv1, exactly like PyTorch module.

        if key is None:
            key = jax.random.PRNGKey(0)
        k1, k2, k3, k4 = jax.random.split(key, 4)
        # Deterministic synthetic parameters (shapes match nn.Conv2d / nn.BatchNorm2d).
        self.w1 = 0.1 * jax.random.normal(
            k1, (out_channels, in_channels, kernel_size, kernel_size), jnp.float32)
        self.b1 = 0.1 * jax.random.normal(k2, (out_channels,), jnp.float32)
        self.g1 = jnp.ones((out_channels,), jnp.float32)
        self.beta1 = jnp.zeros((out_channels,), jnp.float32)

        self.w2 = 0.1 * jax.random.normal(
            k3, (out_channels, out_channels, 3, 3), jnp.float32)
        self.b2 = 0.1 * jax.random.normal(k4, (out_channels,), jnp.float32)
        self.g2 = jnp.ones((out_channels,), jnp.float32)
        self.beta2 = jnp.zeros((out_channels,), jnp.float32)

    @functools.partial(jax.jit, static_argnums=0)
    def __call__(self, x_nchw):
        # NCHW (PyTorch convention) -> NHWC for the kernels.
        x = jnp.transpose(x_nchw, (0, 2, 3, 1)).astype(jnp.float32)
        # conv1: kernel_size=K, stride=S, padding=1 (helper default).
        # Conv bias is intentionally dropped: training-mode BN cancels it exactly.
        x = _conv_bn_relu_layer(x, self.w1, self.g1, self.beta1,
                                k=self.kernel_size, stride=self.stride,
                                padding=1, out_dtype=jnp.bfloat16)
        # conv2: 3x3, stride=1, padding=1. Final output in f32 (module output dtype).
        x = _conv_bn_relu_layer(x, self.w2, self.g2, self.beta2,
                                k=3, stride=1, padding=1, out_dtype=jnp.float32)
        # Back to NCHW to match the PyTorch module's output.
        return jnp.transpose(x, (0, 3, 1, 2))


def _reference(block, x_nchw):
    """Pure-JAX f32 reference (lax conv + bias + BN + ReLU), matching PyTorch."""
    def layer(x, w, b, g, beta, stride, padding):
        y = jax.lax.conv_general_dilated(
            x, w, window_strides=(stride, stride),
            padding=[(padding, padding), (padding, padding)],
            dimension_numbers=("NCHW", "OIHW", "NCHW"))
        y = y + b[None, :, None, None]
        mean = jnp.mean(y, axis=(0, 2, 3), keepdims=True)
        var = jnp.mean((y - mean) ** 2, axis=(0, 2, 3), keepdims=True)
        y = (y - mean) * jax.lax.rsqrt(var + EPS)
        y = y * g[None, :, None, None] + beta[None, :, None, None]
        return jnp.maximum(y, 0.0)

    x = layer(x_nchw, block.w1, block.b1, block.g1, block.beta1, block.stride, 1)
    x = layer(x, block.w2, block.b2, block.g2, block.beta2, 1, 1)
    return x


if __name__ == "__main__":
    key = jax.random.PRNGKey(0)
    k_x, k_p = jax.random.split(key)

    # Small shapes consistent with the module: N=2, Cin=4, H=W=16.
    in_channels, out_channels = 4, 8
    kernel_size, stride, padding = 3, 2, 1
    x = jax.random.normal(k_x, (2, in_channels, 16, 16), jnp.float32)

    block = CAEDownBlockPallas(in_channels, out_channels, kernel_size, stride,
                               padding, key=k_p)
    out = jax.block_until_ready(block(x))

    # Sanity check against a pure-f32 reference of the same math (kernel uses
    # bf16 matmul operands, so the tolerance is loosened accordingly).
    ref = jax.block_until_ready(_reference(block, x))
    assert out.shape == ref.shape, (out.shape, ref.shape)
    max_err = float(jnp.max(jnp.abs(out.astype(jnp.float32) - ref)))
    assert max_err < 5e-2, max_err

    print("KERNEL_OK")
</pallas_src>

<mosaic_0001>
module attributes {stable_mosaic.version = 11 : i64} {
  func.func @_stats_kernel(%arg0: i32, %arg1: memref<128x36xbf16, #tpu.memory_space<vmem>>, %arg2: memref<36x8xbf16, #tpu.memory_space<vmem>>, %arg3: memref<1x8xf32, #tpu.memory_space<vmem>>, %arg4: memref<1x8xf32, #tpu.memory_space<vmem>>, %arg5: memref<2x8xf32, #tpu.memory_space<vmem>>) attributes {dimension_semantics = [#tpu.dimension_semantics<arbitrary>], iteration_bounds = array<i64: 1>, scalar_prefetch = 0 : i64, scratch_operands = 0 : i64, tpu.core_type = #tpu.core_type<tc>, window_params = [{transform_indices = @transform_0, window_bounds = array<i64: 128, 36>}, {pipeline_mode = #tpu.pipeline_mode<synchronous>, transform_indices = @transform_1, window_bounds = array<i64: 36, 8>}, {pipeline_mode = #tpu.pipeline_mode<synchronous>, transform_indices = @transform_2, window_bounds = array<i64: 1, 8>}, {pipeline_mode = #tpu.pipeline_mode<synchronous>, transform_indices = @transform_3, window_bounds = array<i64: 1, 8>}, {pipeline_mode = #tpu.pipeline_mode<synchronous>, transform_indices = @transform_4, window_bounds = array<i64: 2, 8>}]} {
    %c0_i32 = arith.constant 0 : i32
    %0 = arith.cmpi eq, %arg0, %c0_i32 : i32
    %1 = arith.extui %0 : i1 to i32
    %c0_i32_0 = arith.constant 0 : i32
    %2 = arith.cmpi ne, %1, %c0_i32_0 : i32
    scf.if %2 {
      %cst_12 = arith.constant 0.000000e+00 : f32
      %18 = vector.broadcast %cst_12 : f32 to vector<2x8xf32>
      %c0_13 = arith.constant 0 : index
      %c0_14 = arith.constant 0 : index
      %19 = vector.load %arg5[%c0_13, %c0_14] : memref<2x8xf32, #tpu.memory_space<vmem>>, vector<2x8xf32>
      tpu.vector_store %arg5[%c0_13, %c0_14], %18 {strides = array<i32>} : memref<2x8xf32, #tpu.memory_space<vmem>>, vector<2x8xf32>,
    } else {
    }
    %c0 = arith.constant 0 : index
    %c0_1 = arith.constant 0 : index
    %3 = vector.load %arg1[%c0, %c0_1] : memref<128x36xbf16, #tpu.memory_space<vmem>>, vector<128x36xbf16>
    %c0_2 = arith.constant 0 : index
    %c0_3 = arith.constant 0 : index
    %4 = vector.load %arg2[%c0_2, %c0_3] : memref<36x8xbf16, #tpu.memory_space<vmem>>, vector<36x8xbf16>
    %cst = arith.constant dense<0.000000e+00> : vector<128x8xf32>
    %5 = tpu.matmul %3, %4, %cst {dimension_numbers = #tpu.dot_dimension_numbers<[1], [0], [0], [1], [0, 0, 1, 1], [], []>} : vector<128x36xbf16>, vector<36x8xbf16>, vector<128x8xf32> -> vector<128x8xf32>
    %cst_4 = arith.constant dense<0.000000e+00> : vector<8xf32>
    %6 = vector.multi_reduction <add>, %5, %cst_4 [0] : vector<128x8xf32> to vector<8xf32>
    %7 = vector.shape_cast %6 : vector<8xf32> to vector<1x8xf32>
    %8 = arith.mulf %5, %5 : vector<128x8xf32>
    %cst_5 = arith.constant dense<0.000000e+00> : vector<8xf32>
    %9 = vector.multi_reduction <add>, %8, %cst_5 [0] : vector<128x8xf32> to vector<8xf32>
    %10 = vector.shape_cast %9 : vector<8xf32> to vector<1x8xf32>
    %11 = tpu.concatenate %7, %10 in 0 : vector<1x8xf32>, vector<1x8xf32> -> vector<2x8xf32>
    %c0_6 = arith.constant 0 : index
    %c0_7 = arith.constant 0 : index
    %12 = vector.load %arg5[%c0_6, %c0_7] : memref<2x8xf32, #tpu.memory_space<vmem>>, vector<2x8xf32>
    %13 = arith.addf %12, %11 : vector<2x8xf32>
    %c0_8 = arith.constant 0 : index
    %c0_9 = arith.constant 0 : index
    %14 = vector.load %arg5[%c0_8, %c0_9] : memref<2x8xf32, #tpu.memory_space<vmem>>, vector<2x8xf32>
    tpu.vector_store %arg5[%c0_8, %c0_9], %13 {strides = array<i32>} : memref<2x8xf32, #tpu.memory_space<vmem>>, vector<2x8xf32>,
    %c0_i32_10 = arith.constant 0 : i32
    %15 = arith.cmpi eq, %arg0, %c0_i32_10 : i32
    %16 = arith.extui %15 : i1 to i32
    %c0_i32_11 = arith.constant 0 : i32
    %17 = arith.cmpi ne, %16, %c0_i32_11 : i32
    scf.if %17 {
      %c0_12 = arith.constant 0 : index
      %c0_13 = arith.constant 0 : index
      %18 = vector.load %arg5[%c0_12, %c0_13] : memref<2x8xf32, #tpu.memory_space<vmem>>, vector<2x8xf32>
      %19 = vector.extract_strided_slice %18 {offsets = [0, 0], sizes = [1, 8], strides = [1, 1]} : vector<2x8xf32> to vector<1x8xf32>
      %cst_14 = arith.constant 7.812500e-03 : f32
      %20 = vector.broadcast %cst_14 : f32 to vector<1x8xf32>
      %21 = arith.mulf %19, %20 : vector<1x8xf32>
      %22 = vector.extract_strided_slice %18 {offsets = [1, 0], sizes = [1, 8], strides = [1, 1]} : vector<2x8xf32> to vector<1x8xf32>
      %cst_15 = arith.constant 7.812500e-03 : f32
      %23 = vector.broadcast %cst_15 : f32 to vector<1x8xf32>
      %24 = arith.mulf %22, %23 : vector<1x8xf32>
      %25 = arith.mulf %21, %21 : vector<1x8xf32>
      %26 = arith.subf %24, %25 : vector<1x8xf32>
      %c0_16 = arith.constant 0 : index
      %c0_17 = arith.constant 0 : index
      %27 = vector.load %arg3[%c0_16, %c0_17] : memref<1x8xf32, #tpu.memory_space<vmem>>, vector<1x8xf32>
      %cst_18 = arith.constant 9.99999974E-6 : f32
      %28 = vector.broadcast %cst_18 : f32 to vector<1x8xf32>
      %29 = arith.addf %26, %28 : vector<1x8xf32>
      %30 = math.rsqrt %29 : vector<1x8xf32>
      %31 = arith.mulf %27, %30 : vector<1x8xf32>
      %c0_19 = arith.constant 0 : index
      %c0_20 = arith.constant 0 : index
      %32 = vector.load %arg4[%c0_19, %c0_20] : memref<1x8xf32, #tpu.memory_space<vmem>>, vector<1x8xf32>
      %33 = arith.mulf %21, %31 : vector<1x8xf32>
      %34 = arith.subf %32, %33 : vector<1x8xf32>
      %35 = tpu.concatenate %31, %34 in 0 : vector<1x8xf32>, vector<1x8xf32> -> vector<2x8xf32>
      %c0_21 = arith.constant 0 : index
      %c0_22 = arith.constant 0 : index
      %36 = vector.load %arg5[%c0_21, %c0_22] : memref<2x8xf32, #tpu.memory_space<vmem>>, vector<2x8xf32>
      tpu.vector_store %arg5[%c0_21, %c0_22], %35 {strides = array<i32>} : memref<2x8xf32, #tpu.memory_space<vmem>>, vector<2x8xf32>,
    } else {
    }
    return
  }
  func.func @transform_0(%arg0: i32) -> (i32, i32) {
    %c0_i32 = arith.constant 0 : i32
    %c0_i32_0 = arith.constant 0 : i32
    return %arg0, %c0_i32 : i32, i32
  }
  func.func @transform_1(%arg0: i32) -> (i32, i32) {
    %c0_i32 = arith.constant 0 : i32
    %c0_i32_0 = arith.constant 0 : i32
    %c0_i32_1 = arith.constant 0 : i32
    return %c0_i32, %c0_i32_0 : i32, i32
  }
  func.func @transform_2(%arg0: i32) -> (i32, i32) {
    %c0_i32 = arith.constant 0 : i32
    %c0_i32_0 = arith.constant 0 : i32
    %c0_i32_1 = arith.constant 0 : i32
    return %c0_i32, %c0_i32_0 : i32, i32
  }
  func.func @transform_3(%arg0: i32) -> (i32, i32) {
    %c0_i32 = arith.constant 0 : i32
    %c0_i32_0 = arith.constant 0 : i32
    %c0_i32_1 = arith.constant 0 : i32
    return %c0_i32, %c0_i32_0 : i32, i32
  }
  func.func @transform_4(%arg0: i32) -> (i32, i32) {
    %c0_i32 = arith.constant 0 : i32
    %c0_i32_0 = arith.constant 0 : i32
    %c0_i32_1 = arith.constant 0 : i32
    return %c0_i32, %c0_i32_0 : i32, i32
  }
}

module attributes {stable_mosaic.version = 11 : i64} {
  func.func @_norm_kernel(%arg0: i32, %arg1: memref<128x36xbf16, #tpu.memory_space<vmem>>, %arg2: memref<36x8xbf16, #tpu.memory_space<vmem>>, %arg3: memref<2x8xf32, #tpu.memory_space<vmem>>, %arg4: memref<128x8xbf16, #tpu.memory_space<vmem>>) attributes {dimension_semantics = [#tpu.dimension_semantics<parallel>], iteration_bounds = array<i64: 1>, scalar_prefetch = 0 : i64, scratch_operands = 0 : i64, tpu.core_type = #tpu.core_type<tc>, window_params = [{transform_indices = @transform_0, window_bounds = array<i64: 128, 36>}, {pipeline_mode = #tpu.pipeline_mode<synchronous>, transform_indices = @transform_1, window_bounds = array<i64: 36, 8>}, {pipeline_mode = #tpu.pipeline_mode<synchronous>, transform_indices = @transform_2, window_bounds = array<i64: 2, 8>}, {transform_indices = @transform_3, window_bounds = array<i64: 128, 8>}]} {
    %c0 = arith.constant 0 : index
    %c0_0 = arith.constant 0 : index
    %0 = vector.load %arg1[%c0, %c0_0] : memref<128x36xbf16, #tpu.memory_space<vmem>>, vector<128x36xbf16>
    %c0_1 = arith.constant 0 : index
    %c0_2 = arith.constant 0 : index
    %1 = vector.load %arg2[%c0_1, %c0_2] : memref<36x8xbf16, #tpu.memory_space<vmem>>, vector<36x8xbf16>
    %cst = arith.constant dense<0.000000e+00> : vector<128x8xf32>
    %2 = tpu.matmul %0, %1, %cst {dimension_numbers = #tpu.dot_dimension_numbers<[1], [0], [0], [1], [0, 0, 1, 1], [], []>} : vector<128x36xbf16>, vector<36x8xbf16>, vector<128x8xf32> -> vector<128x8xf32>
    %c0_3 = arith.constant 0 : index
    %c0_4 = arith.constant 0 : index
    %3 = vector.load %arg3[%c0_3, %c0_4] : memref<2x8xf32, #tpu.memory_space<vmem>>, vector<1x8xf32>
    %c1 = arith.constant 1 : index
    %c0_5 = arith.constant 0 : index
    %4 = vector.load %arg3[%c1, %c0_5] : memref<2x8xf32, #tpu.memory_space<vmem>>, vector<1x8xf32>
    %5 = vector.broadcast %3 : vector<1x8xf32> to vector<128x8xf32>
    %6 = arith.mulf %2, %5 : vector<128x8xf32>
    %7 = vector.broadcast %4 : vector<1x8xf32> to vector<128x8xf32>
    %8 = arith.addf %6, %7 : vector<128x8xf32>
    %cst_6 = arith.constant 0.000000e+00 : f32
    %9 = vector.broadcast %cst_6 : f32 to vector<128x8xf32>
    %10 = arith.maximumf %8, %9 : vector<128x8xf32>
    %11 = arith.truncf %10 : vector<128x8xf32> to vector<128x8xbf16>
    %c0_7 = arith.constant 0 : index
    %c0_8 = arith.constant 0 : index
    %12 = vector.load %arg4[%c0_7, %c0_8] : memref<128x8xbf16, #tpu.memory_space<vmem>>, vector<128x8xbf16>
    tpu.vector_store %arg4[%c0_7, %c0_8], %11 {strides = array<i32>} : memref<128x8xbf16, #tpu.memory_space<vmem>>, vector<128x8xbf16>,
    return
  }
  func.func @transform_0(%arg0: i32) -> (i32, i32) {
    %c0_i32 = arith.constant 0 : i32
    %c0_i32_0 = arith.constant 0 : i32
    return %arg0, %c0_i32 : i32, i32
  }
  func.func @transform_1(%arg0: i32) -> (i32, i32) {
    %c0_i32 = arith.constant 0 : i32
    %c0_i32_0 = arith.constant 0 : i32
    %c0_i32_1 = arith.constant 0 : i32
    return %c0_i32, %c0_i32_0 : i32, i32
  }
  func.func @transform_2(%arg0: i32) -> (i32, i32) {
    %c0_i32 = arith.constant 0 : i32
    %c0_i32_0 = arith.constant 0 : i32
    %c0_i32_1 = arith.constant 0 : i32
    return %c0_i32, %c0_i32_0 : i32, i32
  }
  func.func @transform_3(%arg0: i32) -> (i32, i32) {
    %c0_i32 = arith.constant 0 : i32
    %c0_i32_0 = arith.constant 0 : i32
    return %arg0, %c0_i32 : i32, i32
  }
}

module attributes {stable_mosaic.version = 11 : i64} {
  func.func @_stats_kernel(%arg0: i32, %arg1: memref<128x72xbf16, #tpu.memory_space<vmem>>, %arg2: memref<72x8xbf16, #tpu.memory_space<vmem>>, %arg3: memref<1x8xf32, #tpu.memory_space<vmem>>, %arg4: memref<1x8xf32, #tpu.memory_space<vmem>>, %arg5: memref<2x8xf32, #tpu.memory_space<vmem>>) attributes {dimension_semantics = [#tpu.dimension_semantics<arbitrary>], iteration_bounds = array<i64: 1>, scalar_prefetch = 0 : i64, scratch_operands = 0 : i64, tpu.core_type = #tpu.core_type<tc>, window_params = [{transform_indices = @transform_0, window_bounds = array<i64: 128, 72>}, {pipeline_mode = #tpu.pipeline_mode<synchronous>, transform_indices = @transform_1, window_bounds = array<i64: 72, 8>}, {pipeline_mode = #tpu.pipeline_mode<synchronous>, transform_indices = @transform_2, window_bounds = array<i64: 1, 8>}, {pipeline_mode = #tpu.pipeline_mode<synchronous>, transform_indices = @transform_3, window_bounds = array<i64: 1, 8>}, {pipeline_mode = #tpu.pipeline_mode<synchronous>, transform_indices = @transform_4, window_bounds = array<i64: 2, 8>}]} {
    %c0_i32 = arith.constant 0 : i32
    %0 = arith.cmpi eq, %arg0, %c0_i32 : i32
    %1 = arith.extui %0 : i1 to i32
    %c0_i32_0 = arith.constant 0 : i32
    %2 = arith.cmpi ne, %1, %c0_i32_0 : i32
    scf.if %2 {
      %cst_12 = arith.constant 0.000000e+00 : f32
      %18 = vector.broadcast %cst_12 : f32 to vector<2x8xf32>
      %c0_13 = arith.constant 0 : index
      %c0_14 = arith.constant 0 : index
      %19 = vector.load %arg5[%c0_13, %c0_14] : memref<2x8xf32, #tpu.memory_space<vmem>>, vector<2x8xf32>
      tpu.vector_store %arg5[%c0_13, %c0_14], %18 {strides = array<i32>} : memref<2x8xf32, #tpu.memory_space<vmem>>, vector<2x8xf32>,
    } else {
    }
    %c0 = arith.constant 0 : index
    %c0_1 = arith.constant 0 : index
    %3 = vector.load %arg1[%c0, %c0_1] : memref<128x72xbf16, #tpu.memory_space<vmem>>, vector<128x72xbf16>
    %c0_2 = arith.constant 0 : index
    %c0_3 = arith.constant 0 : index
    %4 = vector.load %arg2[%c0_2, %c0_3] : memref<72x8xbf16, #tpu.memory_space<vmem>>, vector<72x8xbf16>
    %cst = arith.constant dense<0.000000e+00> : vector<128x8xf32>
    %5 = tpu.matmul %3, %4, %cst {dimension_numbers = #tpu.dot_dimension_numbers<[1], [0], [0], [1], [0, 0, 1, 1], [], []>} : vector<128x72xbf16>, vector<72x8xbf16>, vector<128x8xf32> -> vector<128x8xf32>
    %cst_4 = arith.constant dense<0.000000e+00> : vector<8xf32>
    %6 = vector.multi_reduction <add>, %5, %cst_4 [0] : vector<128x8xf32> to vector<8xf32>
    %7 = vector.shape_cast %6 : vector<8xf32> to vector<1x8xf32>
    %8 = arith.mulf %5, %5 : vector<128x8xf32>
    %cst_5 = arith.constant dense<0.000000e+00> : vector<8xf32>
    %9 = vector.multi_reduction <add>, %8, %cst_5 [0] : vector<128x8xf32> to vector<8xf32>
    %10 = vector.shape_cast %9 : vector<8xf32> to vector<1x8xf32>
    %11 = tpu.concatenate %7, %10 in 0 : vector<1x8xf32>, vector<1x8xf32> -> vector<2x8xf32>
    %c0_6 = arith.constant 0 : index
    %c0_7 = arith.constant 0 : index
    %12 = vector.load %arg5[%c0_6, %c0_7] : memref<2x8xf32, #tpu.memory_space<vmem>>, vector<2x8xf32>
    %13 = arith.addf %12, %11 : vector<2x8xf32>
    %c0_8 = arith.constant 0 : index
    %c0_9 = arith.constant 0 : index
    %14 = vector.load %arg5[%c0_8, %c0_9] : memref<2x8xf32, #tpu.memory_space<vmem>>, vector<2x8xf32>
    tpu.vector_store %arg5[%c0_8, %c0_9], %13 {strides = array<i32>} : memref<2x8xf32, #tpu.memory_space<vmem>>, vector<2x8xf32>,
    %c0_i32_10 = arith.constant 0 : i32
    %15 = arith.cmpi eq, %arg0, %c0_i32_10 : i32
    %16 = arith.extui %15 : i1 to i32
    %c0_i32_11 = arith.constant 0 : i32
    %17 = arith.cmpi ne, %16, %c0_i32_11 : i32
    scf.if %17 {
      %c0_12 = arith.constant 0 : index
      %c0_13 = arith.constant 0 : index
      %18 = vector.load %arg5[%c0_12, %c0_13] : memref<2x8xf32, #tpu.memory_space<vmem>>, vector<2x8xf32>
      %19 = vector.extract_strided_slice %18 {offsets = [0, 0], sizes = [1, 8], strides = [1, 1]} : vector<2x8xf32> to vector<1x8xf32>
      %cst_14 = arith.constant 7.812500e-03 : f32
      %20 = vector.broadcast %cst_14 : f32 to vector<1x8xf32>
      %21 = arith.mulf %19, %20 : vector<1x8xf32>
      %22 = vector.extract_strided_slice %18 {offsets = [1, 0], sizes = [1, 8], strides = [1, 1]} : vector<2x8xf32> to vector<1x8xf32>
      %cst_15 = arith.constant 7.812500e-03 : f32
      %23 = vector.broadcast %cst_15 : f32 to vector<1x8xf32>
      %24 = arith.mulf %22, %23 : vector<1x8xf32>
      %25 = arith.mulf %21, %21 : vector<1x8xf32>
      %26 = arith.subf %24, %25 : vector<1x8xf32>
      %c0_16 = arith.constant 0 : index
      %c0_17 = arith.constant 0 : index
      %27 = vector.load %arg3[%c0_16, %c0_17] : memref<1x8xf32, #tpu.memory_space<vmem>>, vector<1x8xf32>
      %cst_18 = arith.constant 9.99999974E-6 : f32
      %28 = vector.broadcast %cst_18 : f32 to vector<1x8xf32>
      %29 = arith.addf %26, %28 : vector<1x8xf32>
      %30 = math.rsqrt %29 : vector<1x8xf32>
      %31 = arith.mulf %27, %30 : vector<1x8xf32>
      %c0_19 = arith.constant 0 : index
      %c0_20 = arith.constant 0 : index
      %32 = vector.load %arg4[%c0_19, %c0_20] : memref<1x8xf32, #tpu.memory_space<vmem>>, vector<1x8xf32>
      %33 = arith.mulf %21, %31 : vector<1x8xf32>
      %34 = arith.subf %32, %33 : vector<1x8xf32>
      %35 = tpu.concatenate %31, %34 in 0 : vector<1x8xf32>, vector<1x8xf32> -> vector<2x8xf32>
      %c0_21 = arith.constant 0 : index
      %c0_22 = arith.constant 0 : index
      %36 = vector.load %arg5[%c0_21, %c0_22] : memref<2x8xf32, #tpu.memory_space<vmem>>, vector<2x8xf32>
      tpu.vector_store %arg5[%c0_21, %c0_22], %35 {strides = array<i32>} : memref<2x8xf32, #tpu.memory_space<vmem>>, vector<2x8xf32>,
    } else {
    }
    return
  }
  func.func @transform_0(%arg0: i32) -> (i32, i32) {
    %c0_i32 = arith.constant 0 : i32
    %c0_i32_0 = arith.constant 0 : i32
    return %arg0, %c0_i32 : i32, i32
  }
  func.func @transform_1(%arg0: i32) -> (i32, i32) {
    %c0_i32 = arith.constant 0 : i32
    %c0_i32_0 = arith.constant 0 : i32
    %c0_i32_1 = arith.constant 0 : i32
    return %c0_i32, %c0_i32_0 : i32, i32
  }
  func.func @transform_2(%arg0: i32) -> (i32, i32) {
    %c0_i32 = arith.constant 0 : i32
    %c0_i32_0 = arith.constant 0 : i32
    %c0_i32_1 = arith.constant 0 : i32
    return %c0_i32, %c0_i32_0 : i32, i32
  }
  func.func @transform_3(%arg0: i32) -> (i32, i32) {
    %c0_i32 = arith.constant 0 : i32
    %c0_i32_0 = arith.constant 0 : i32
    %c0_i32_1 = arith.constant 0 : i32
    return %c0_i32, %c0_i32_0 : i32, i32
  }
  func.func @transform_4(%arg0: i32) -> (i32, i32) {
    %c0_i32 = arith.constant 0 : i32
    %c0_i32_0 = arith.constant 0 : i32
    %c0_i32_1 = arith.constant 0 : i32
    return %c0_i32, %c0_i32_0 : i32, i32
  }
}

module attributes {stable_mosaic.version = 11 : i64} {
  func.func @_norm_kernel(%arg0: i32, %arg1: memref<128x72xbf16, #tpu.memory_space<vmem>>, %arg2: memref<72x8xbf16, #tpu.memory_space<vmem>>, %arg3: memref<2x8xf32, #tpu.memory_space<vmem>>, %arg4: memref<128x8xf32, #tpu.memory_space<vmem>>) attributes {dimension_semantics = [#tpu.dimension_semantics<parallel>], iteration_bounds = array<i64: 1>, scalar_prefetch = 0 : i64, scratch_operands = 0 : i64, tpu.core_type = #tpu.core_type<tc>, window_params = [{transform_indices = @transform_0, window_bounds = array<i64: 128, 72>}, {pipeline_mode = #tpu.pipeline_mode<synchronous>, transform_indices = @transform_1, window_bounds = array<i64: 72, 8>}, {pipeline_mode = #tpu.pipeline_mode<synchronous>, transform_indices = @transform_2, window_bounds = array<i64: 2, 8>}, {transform_indices = @transform_3, window_bounds = array<i64: 128, 8>}]} {
    %c0 = arith.constant 0 : index
    %c0_0 = arith.constant 0 : index
    %0 = vector.load %arg1[%c0, %c0_0] : memref<128x72xbf16, #tpu.memory_space<vmem>>, vector<128x72xbf16>
    %c0_1 = arith.constant 0 : index
    %c0_2 = arith.constant 0 : index
    %1 = vector.load %arg2[%c0_1, %c0_2] : memref<72x8xbf16, #tpu.memory_space<vmem>>, vector<72x8xbf16>
    %cst = arith.constant dense<0.000000e+00> : vector<128x8xf32>
    %2 = tpu.matmul %0, %1, %cst {dimension_numbers = #tpu.dot_dimension_numbers<[1], [0], [0], [1], [0, 0, 1, 1], [], []>} : vector<128x72xbf16>, vector<72x8xbf16>, vector<128x8xf32> -> vector<128x8xf32>
    %c0_3 = arith.constant 0 : index
    %c0_4 = arith.constant 0 : index
    %3 = vector.load %arg3[%c0_3, %c0_4] : memref<2x8xf32, #tpu.memory_space<vmem>>, vector<1x8xf32>
    %c1 = arith.constant 1 : index
    %c0_5 = arith.constant 0 : index
    %4 = vector.load %arg3[%c1, %c0_5] : memref<2x8xf32, #tpu.memory_space<vmem>>, vector<1x8xf32>
    %5 = vector.broadcast %3 : vector<1x8xf32> to vector<128x8xf32>
    %6 = arith.mulf %2, %5 : vector<128x8xf32>
    %7 = vector.broadcast %4 : vector<1x8xf32> to vector<128x8xf32>
    %8 = arith.addf %6, %7 : vector<128x8xf32>
    %cst_6 = arith.constant 0.000000e+00 : f32
    %9 = vector.broadcast %cst_6 : f32 to vector<128x8xf32>
    %10 = arith.maximumf %8, %9 : vector<128x8xf32>
    %c0_7 = arith.constant 0 : index
    %c0_8 = arith.constant 0 : index
    %11 = vector.load %arg4[%c0_7, %c0_8] : memref<128x8xf32, #tpu.memory_space<vmem>>, vector<128x8xf32>
    tpu.vector_store %arg4[%c0_7, %c0_8], %10 {strides = array<i32>} : memref<128x8xf32, #tpu.memory_space<vmem>>, vector<128x8xf32>,
    return
  }
  func.func @transform_0(%arg0: i32) -> (i32, i32) {
    %c0_i32 = arith.constant 0 : i32
    %c0_i32_0 = arith.constant 0 : i32
    return %arg0, %c0_i32 : i32, i32
  }
  func.func @transform_1(%arg0: i32) -> (i32, i32) {
    %c0_i32 = arith.constant 0 : i32
    %c0_i32_0 = arith.constant 0 : i32
    %c0_i32_1 = arith.constant 0 : i32
    return %c0_i32, %c0_i32_0 : i32, i32
  }
  func.func @transform_2(%arg0: i32) -> (i32, i32) {
    %c0_i32 = arith.constant 0 : i32
    %c0_i32_0 = arith.constant 0 : i32
    %c0_i32_1 = arith.constant 0 : i32
    return %c0_i32, %c0_i32_0 : i32, i32
  }
  func.func @transform_3(%arg0: i32) -> (i32, i32) {
    %c0_i32 = arith.constant 0 : i32
    %c0_i32_0 = arith.constant 0 : i32
    return %arg0, %c0_i32 : i32, i32
  }
}

</mosaic_0001>

<llo_original>
// kernel: a_call__.5
$region0: #{a_call__.5}
  #allocation0 [shape = 'u32[]', space=smem, size = 0x4, offset = 0x4, fixed_abs, tag = 'smem constant byte address 0x4 - core index']
  #allocation1 [shape = 'u32[144,128]{1,0:T(1,128)}', space=vmem, size = 0x12000, scoped, tag = 'internal scratch']
  %s0 = inlined_call_operand.vmem [shape: bf16[128,36], index: 0, kind: input, shape index: {}]
  %s1 = inlined_call_operand.vmem [shape: bf16[36,8], index: 1, kind: input, shape index: {}]
  %s2 = inlined_call_operand.vmem [shape: f32[2,8], index: 2, kind: input, shape index: {}]
  %s3 = inlined_call_operand.vmem [shape: bf16[128,8], index: 3, kind: output, shape index: {}]
  %s4 = sld [smem:[#allocation0]]
  $region22: #{a_call__.5} parent=0
    _
  %s6 = ssub.s32 1, %s4
  %s7 = scalar_select 0, %s6, %s4
  // Predicated region
  $region2: #{a_call__.5} parent=0 // pred_check
    _
  $region3: #{a_call__.5} parent=0 // pred_check_branch
    %9 = sbr.rel (0) target = $region5
  $region4: #{a_call__.5} parent=0 // pred_region
    _
  $region5: #{a_call__.5} parent=0 // pred_fallthru
    _
  // Predicated region
  $region6: #{a_call__.5} parent=0 // pred_check
    _
  $region7: #{a_call__.5} parent=0 // pred_check_branch
    %11 = sbr.rel (0) target = $region9
  $region8: #{a_call__.5} parent=0 // pred_region
    _
  $region9: #{a_call__.5} parent=0 // pred_fallthru
    _
  // Predicated region
  $region10: #{a_call__.5} parent=0 // pred_check
    _
  $region11: #{a_call__.5} parent=0 // pred_check_branch
    %13 = sbr.rel (0) target = $region13
  $region12: #{a_call__.5} parent=0 // pred_region
    _
  $region13: #{a_call__.5} parent=0 // pred_fallthru
    _
  %v15 = vld [vmem:[%s0] sm:$0xf]
  %v16 = vld [vmem:[%s0 + $0x4] sm:$0xf]
  %v17 = vld [vmem:[%s0 + $0x8] sm:$0xf]
  %v18 = vld [vmem:[%s0 + $0xc] sm:$0xf]
  %v19 = vld [vmem:[%s0 + $0x10] sm:$0xf]
  %v20 = vld [vmem:[%s0 + $0x14] sm:$0xf]
  %v21 = vld [vmem:[%s0 + $0x18] sm:$0xf]
  %v22 = vld [vmem:[%s0 + $0x1c] sm:$0xf]
  %v23 = vld [vmem:[%s0 + $0x20] sm:$0xf]
  %v24 = vld [vmem:[%s0 + $0x24] sm:$0xf]
  %v25 = vld [vmem:[%s0 + $0x28] sm:$0xf]
  %v26 = vld [vmem:[%s0 + $0x2c] sm:$0xf]
  %v27 = vld [vmem:[%s0 + $0x30] sm:$0xf]
  %v28 = vld [vmem:[%s0 + $0x34] sm:$0xf]
  %v29 = vld [vmem:[%s0 + $0x38] sm:$0xf]
  %v30 = vld [vmem:[%s0 + $0x3c] sm:$0xf]
  %v31 = vld [vmem:[%s1] sm:$0xf]
  %v32 = vld [vmem:[%s1 + $0x4] sm:$0xf]
  %v33 = vld [vmem:[%s1 + $0x8] sm:$0xf]
  %v34 = vld [vmem:[%s1 + $0xc] sm:$0xf]
  %v35 = vld [vmem:[%s1 + $0x10] sm:$0x3]
  %v52 = vunpack.c.l.b16 %v15
  %v53 = vunpack.c.l.b16 %v16
  %v54 = vunpack.c.l.b16 %v17
  %v55 = vunpack.c.l.b16 %v18
  %v56 = vunpack.c.l.b16 %v19
  %v57 = vunpack.c.l.b16 %v20
  %v58 = vunpack.c.l.b16 %v21
  %v59 = vunpack.c.l.b16 %v22
  %v60 = vunpack.c.l.b16 %v23
  %v61 = vunpack.c.l.b16 %v24
  %v62 = vunpack.c.l.b16 %v25
  %v63 = vunpack.c.l.b16 %v26
  %v64 = vunpack.c.l.b16 %v27
  %v65 = vunpack.c.l.b16 %v28
  %v66 = vunpack.c.l.b16 %v29
  %v67 = vunpack.c.l.b16 %v30
  %v68 = vpack.c.b16 %v53, %v52
  %v69 = vpack.c.b16 %v55, %v54
  %v70 = vpack.c.b16 %v57, %v56
  %v71 = vpack.c.b16 %v59, %v58
  %v72 = vpack.c.b16 %v61, %v60
  %v73 = vpack.c.b16 %v63, %v62
  %v74 = vpack.c.b16 %v65, %v64
  %v75 = vpack.c.b16 %v67, %v66
  %v81 = vunpack.c.l.b16 %v31
  %v82 = vunpack.c.l.b16 %v32
  %v83 = vunpack.c.l.b16 %v33
  %v84 = vunpack.c.l.b16 %v34
  %v85 = vunpack.c.l.b16 %v35
  %v86 = vpack.c.b16 %v82, %v81
  %v87 = vpack.c.b16 %v84, %v83
  %v88 = vpack.c.b16 %v85, %v85
  %vm91 = vcmask 293888
  %v93 = vsel %vm91, %v68, 0
  %v96 = vsel %vm91, %v69, 0
  %v99 = vsel %vm91, %v70, 0
  %v102 = vsel %vm91, %v71, 0
  %v105 = vsel %vm91, %v72, 0
  %v108 = vsel %vm91, %v73, 0
  %v111 = vsel %vm91, %v74, 0
  %v114 = vsel %vm91, %v75, 0
  %vm116 = vcmask 1041408
  %v118 = vsel %vm116, %v88, 0
  %120 = vmatprep.subr.bf16.mxu0 0
  %121 = vmatpush1.bf16.msra.mxu0 %v86
  %122 = vmatprep.subr.bf16.mxu0 0
  %123 = vmatpush1.bf16.msra.mxu0 %v87
  %124 = vmatprep.subr.bf16.mxu0 0
  %125 = vmatpush1.bf16.msra.mxu0 %v118
  %126 = vmatprep.subr.bf16.mxu0 0
  %127 = vmatpush1.bf16.msra.mxu0 0
  %128 = vmatprep.subr.bf16.mxu0 0
  %129 = vmatpush1.bf16.msra.mxu0 0
  %130 = vmatprep.subr.bf16.mxu0 0
  %131 = vmatpush1.bf16.msra.mxu0 0
  %132 = vmatprep.subr.bf16.mxu0 0
  %133 = vmatpush1.bf16.msra.mxu0 0
  %134 = vmatprep.subr.bf16.mxu0 0
  %135 = vmatpush1.bf16.msra.mxu0 0
  %136 = vmatprep.subr.bf16.mxu0 0
  %137 = vmatpush1.bf16.msra.mxu0 0
  %138 = vmatprep.subr.bf16.mxu0 0
  %139 = vmatpush1.bf16.msra.mxu0 0
  %140 = vmatprep.subr.bf16.mxu0 0
  %141 = vmatpush1.bf16.msra.mxu0 0
  %142 = vmatprep.subr.bf16.mxu0 0
  %143 = vmatpush1.bf16.msra.mxu0 0
  %144 = vmatprep.subr.bf16.mxu0 0
  %145 = vmatpush1.bf16.msra.mxu0 0
  %146 = vmatprep.subr.bf16.mxu0 0
  %147 = vmatpush1.bf16.msra.mxu0 0
  %148 = vmatprep.subr.bf16.mxu0 0
  %149 = vmatpush1.bf16.msra.mxu0 0
  %150 = vmatprep.subr.bf16.mxu0 0
  %151 = vmatpush1.bf16.msra.mxu0 0
  %152 = vmatprep.mubr.bf16.mxu0 0
  %153 = vmatmul.mubr.bf16.gmra.mrb[0].mxu0 %v93
  %v154 = vpop.f32.mrb[0].mxu0
  %v155 = vadd.f32 0.0, %v154
  %v156 = vpop.f32.mrb[0].mxu0
  %v157 = vpop.f32.mrb[0].mxu0
  %v158 = vadd.f32 0.0, %v157
  %v159 = vpop.f32.mrb[0].mxu0
  %160 = vmatprep.mubr.bf16.mxu0 0
  %161 = vmatmul.mubr.bf16.gmra.mrb[0].mxu0 %v96
  %v162 = vpop.f32.mrb[0].mxu0
  %v163 = vadd.f32 0.0, %v162
  %v164 = vpop.f32.mrb[0].mxu0
  %v165 = vpop.f32.mrb[0].mxu0
  %v166 = vadd.f32 0.0, %v165
  %v167 = vpop.f32.mrb[0].mxu0
  %168 = vmatprep.mubr.bf16.mxu0 0
  %169 = vmatmul.mubr.bf16.gmra.mrb[0].mxu0 %v99
  %v170 = vpop.f32.mrb[0].mxu0
  %v171 = vadd.f32 0.0, %v170
  %v172 = vpop.f32.mrb[0].mxu0
  %v173 = vpop.f32.mrb[0].mxu0
  %v174 = vadd.f32 0.0, %v173
  %v175 = vpop.f32.mrb[0].mxu0
  %176 = vmatprep.mubr.bf16.mxu0 0
  %177 = vmatmul.mubr.bf16.gmra.mrb[0].mxu0 %v102
  %v178 = vpop.f32.mrb[0].mxu0
  %v179 = vadd.f32 0.0, %v178
  %v180 = vpop.f32.mrb[0].mxu0
  %v181 = vpop.f32.mrb[0].mxu0
  %v182 = vadd.f32 0.0, %v181
  %v183 = vpop.f32.mrb[0].mxu0
  %184 = vmatprep.mubr.bf16.mxu0 0
  %185 = vmatmul.mubr.bf16.gmra.mrb[0].mxu0 %v105
  %v186 = vpop.f32.mrb[0].mxu0
  %v187 = vadd.f32 0.0, %v186
  %v188 = vpop.f32.mrb[0].mxu0
  %v189 = vpop.f32.mrb[0].mxu0
  %v190 = vadd.f32 0.0, %v189
  %v191 = vpop.f32.mrb[0].mxu0
  %192 = vmatprep.mubr.bf16.mxu0 0
  %193 = vmatmul.mubr.bf16.gmra.mrb[0].mxu0 %v108
  %v194 = vpop.f32.mrb[0].mxu0
  %v195 = vadd.f32 0.0, %v194
  %v196 = vpop.f32.mrb[0].mxu0
  %v197 = vpop.f32.mrb[0].mxu0
  %v198 = vadd.f32 0.0, %v197
  %v199 = vpop.f32.mrb[0].mxu0
  %200 = vmatprep.mubr.bf16.mxu0 0
  %201 = vmatmul.mubr.bf16.gmra.mrb[0].mxu0 %v111
  %v202 = vpop.f32.mrb[0].mxu0
  %v203 = vadd.f32 0.0, %v202
  %v204 = vpop.f32.mrb[0].mxu0
  %v205 = vpop.f32.mrb[0].mxu0
  %v206 = vadd.f32 0.0, %v205
  %v207 = vpop.f32.mrb[0].mxu0
  %208 = vmatprep.mubr.bf16.mxu0 0
  %209 = vmatmul.mubr.bf16.gmra.mrb[0].mxu0 %v114
  %v210 = vpop.f32.mrb[0].mxu0
  %v211 = vadd.f32 0.0, %v210
  %v212 = vpop.f32.mrb[0].mxu0
  %v213 = vpop.f32.mrb[0].mxu0
  %v214 = vadd.f32 0.0, %v213
  %v215 = vpop.f32.mrb[0].mxu0
  %216 = vdwg.mxu0
  %v217 = vld [vmem:[%s2] sm:$0x1]
  %v218 = vld [vmem:[%s2 + $0x1] sm:$0x1]
  %v219 = vlaneseq
  %v220 = vshrl.u32 %v219, 7
  %v221 = vsub.s32 0, %v220
  %v222 = vrot.slane %v217, %v221
  %v223 = vmul.f32 %v155, %v222
  %v224 = vmul.f32 %v158, %v222
  %v225 = vmul.f32 %v163, %v222
  %v226 = vmul.f32 %v166, %v222
  %v227 = vmul.f32 %v171, %v222
  %v228 = vmul.f32 %v174, %v222
  %v229 = vmul.f32 %v179, %v222
  %v230 = vmul.f32 %v182, %v222
  %v231 = vmul.f32 %v187, %v222
  %v232 = vmul.f32 %v190, %v222
  %v233 = vmul.f32 %v195, %v222
  %v234 = vmul.f32 %v198, %v222
  %v235 = vmul.f32 %v203, %v222
  %v236 = vmul.f32 %v206, %v222
  %v237 = vmul.f32 %v211, %v222
  %v238 = vmul.f32 %v214, %v222
  %v239 = vlaneseq
  %v240 = vshrl.u32 %v239, 7
  %v241 = vsub.s32 0, %v240
  %v242 = vrot.slane %v218, %v241
  %v243 = vadd.f32 %v223, %v242
  %v244 = vadd.f32 %v224, %v242
  %v245 = vadd.f32 %v225, %v242
  %v246 = vadd.f32 %v226, %v242
  %v247 = vadd.f32 %v227, %v242
  %v248 = vadd.f32 %v228, %v242
  %v249 = vadd.f32 %v229, %v242
  %v250 = vadd.f32 %v230, %v242
  %v251 = vadd.f32 %v231, %v242
  %v252 = vadd.f32 %v232, %v242
  %v253 = vadd.f32 %v233, %v242
  %v254 = vadd.f32 %v234, %v242
  %v255 = vadd.f32 %v235, %v242
  %v256 = vadd.f32 %v236, %v242
  %v257 = vadd.f32 %v237, %v242
  %v258 = vadd.f32 %v238, %v242
  %v259 = vmax.f32 %v243, 0.0
  %v260 = vmax.f32 %v244, 0.0
  %v261 = vmax.f32 %v245, 0.0
  %v262 = vmax.f32 %v246, 0.0
  %v263 = vmax.f32 %v247, 0.0
  %v264 = vmax.f32 %v248, 0.0
  %v265 = vmax.f32 %v249, 0.0
  %v266 = vmax.f32 %v250, 0.0
  %v267 = vmax.f32 %v251, 0.0
  %v268 = vmax.f32 %v252, 0.0
  %v269 = vmax.f32 %v253, 0.0
  %v270 = vmax.f32 %v254, 0.0
  %v271 = vmax.f32 %v255, 0.0
  %v272 = vmax.f32 %v256, 0.0
  %v273 = vmax.f32 %v257, 0.0
  %v274 = vmax.f32 %v258, 0.0
  %v275 = vpack.c.bf16 %v260, %v259
  %v276 = vpack.c.bf16 %v262, %v261
  %v277 = vpack.c.bf16 %v264, %v263
  %v278 = vpack.c.bf16 %v266, %v265
  %v279 = vpack.c.bf16 %v268, %v267
  %v280 = vpack.c.bf16 %v270, %v269
  %v281 = vpack.c.bf16 %v272, %v271
  %v282 = vpack.c.bf16 %v274, %v273
  %v291 = vunpack.c.l.b16 %v275
  %v292 = vunpack.c.h.b16 %v275
  %v293 = vunpack.c.l.b16 %v276
  %v294 = vunpack.c.h.b16 %v276
  %v295 = vunpack.c.l.b16 %v277
  %v296 = vunpack.c.h.b16 %v277
  %v297 = vunpack.c.l.b16 %v278
  %v298 = vunpack.c.h.b16 %v278
  %v299 = vunpack.c.l.b16 %v279
  %v300 = vunpack.c.h.b16 %v279
  %v301 = vunpack.c.l.b16 %v280
  %v302 = vunpack.c.h.b16 %v280
  %v303 = vunpack.c.l.b16 %v281
  %v304 = vunpack.c.h.b16 %v281
  %v305 = vunpack.c.l.b16 %v282
  %v306 = vunpack.c.h.b16 %v282
  %v307 = vpack.c.b16 %v291, %v291
  %v308 = vpack.c.b16 %v292, %v292
  %v309 = vpack.c.b16 %v293, %v293
  %v310 = vpack.c.b16 %v294, %v294
  %v311 = vpack.c.b16 %v295, %v295
  %v312 = vpack.c.b16 %v296, %v296
  %v313 = vpack.c.b16 %v297, %v297
  %v314 = vpack.c.b16 %v298, %v298
  %v315 = vpack.c.b16 %v299, %v299
  %v316 = vpack.c.b16 %v300, %v300
  %v317 = vpack.c.b16 %v301, %v301
  %v318 = vpack.c.b16 %v302, %v302
  %v319 = vpack.c.b16 %v303, %v303
  %v320 = vpack.c.b16 %v304, %v304
  %v321 = vpack.c.b16 %v305, %v305
  %v322 = vpack.c.b16 %v306, %v306
  %vm339 = vcmask 60416
  %340 = vst.msk [vmem:[%s3] sm:$0xf] %vm339, %v307
  %341 = vst.msk [vmem:[%s3 + $0x4] sm:$0xf] %vm339, %v308
  %342 = vst.msk [vmem:[%s3 + $0x8] sm:$0xf] %vm339, %v309
  %343 = vst.msk [vmem:[%s3 + $0xc] sm:$0xf] %vm339, %v310
  %344 = vst.msk [vmem:[%s3 + $0x10] sm:$0xf] %vm339, %v311
  %345 = vst.msk [vmem:[%s3 + $0x14] sm:$0xf] %vm339, %v312
  %346 = vst.msk [vmem:[%s3 + $0x18] sm:$0xf] %vm339, %v313
  %347 = vst.msk [vmem:[%s3 + $0x1c] sm:$0xf] %vm339, %v314
  %348 = vst.msk [vmem:[%s3 + $0x20] sm:$0xf] %vm339, %v315
  %349 = vst.msk [vmem:[%s3 + $0x24] sm:$0xf] %vm339, %v316
  %350 = vst.msk [vmem:[%s3 + $0x28] sm:$0xf] %vm339, %v317
  %351 = vst.msk [vmem:[%s3 + $0x2c] sm:$0xf] %vm339, %v318
  %352 = vst.msk [vmem:[%s3 + $0x30] sm:$0xf] %vm339, %v319
  %353 = vst.msk [vmem:[%s3 + $0x34] sm:$0xf] %vm339, %v320
  %354 = vst.msk [vmem:[%s3 + $0x38] sm:$0xf] %vm339, %v321
  %355 = vst.msk [vmem:[%s3 + $0x3c] sm:$0xf] %vm339, %v322
  // Predicated region
  $region14: #{a_call__.5} parent=0 // pred_check
    _
  $region15: #{a_call__.5} parent=0 // pred_check_branch
    %357 = sbr.rel (0) target = $region17
  $region16: #{a_call__.5} parent=0 // pred_region
    _
  $region17: #{a_call__.5} parent=0 // pred_fallthru
    _
  // Predicated region
  $region18: #{a_call__.5} parent=0 // pred_check
    _
  $region19: #{a_call__.5} parent=0 // pred_check_branch
    %359 = sbr.rel (0) target = $region21
  $region20: #{a_call__.5} parent=0 // pred_region
    _
  $region21: #{a_call__.5} parent=0 // pred_fallthru
    _

// kernel: a_call__.4
$region0: #{a_call__.4}
  #allocation0 [shape = 'u32[]', space=smem, size = 0x4, offset = 0x4, fixed_abs, tag = 'smem constant byte address 0x4 - core index']
  #allocation1 [shape = 'u32[144,128]{1,0:T(1,128)}', space=vmem, size = 0x12000, scoped, tag = 'internal scratch']
  %s0 = inlined_call_operand.vmem [shape: bf16[128,36], index: 0, kind: input, shape index: {}]
  %s1 = inlined_call_operand.vmem [shape: bf16[36,8], index: 1, kind: input, shape index: {}]
  %s2 = inlined_call_operand.vmem [shape: f32[1,8], index: 2, kind: input, shape index: {}]
  %s3 = inlined_call_operand.vmem [shape: f32[1,8], index: 3, kind: input, shape index: {}]
  %s4 = inlined_call_operand.vmem [shape: f32[2,8], index: 4, kind: output, shape index: {}]
  %s5 = sld [smem:[#allocation0]]
  $region34: #{a_call__.4} parent=0
    _
  %s7 = ssub.s32 1, %s5
  %s8 = scalar_select 0, %s7, %s5
  // Predicated region
  $region2: #{a_call__.4} parent=0 // pred_check
    _
  $region3: #{a_call__.4} parent=0 // pred_check_branch
    %10 = sbr.rel (0) target = $region5
  $region4: #{a_call__.4} parent=0 // pred_region
    _
  $region5: #{a_call__.4} parent=0 // pred_fallthru
    _
  // Predicated region
  $region6: #{a_call__.4} parent=0 // pred_check
    _
  $region7: #{a_call__.4} parent=0 // pred_check_branch
    %12 = sbr.rel (0) target = $region9
  $region8: #{a_call__.4} parent=0 // pred_region
    _
  $region9: #{a_call__.4} parent=0 // pred_fallthru
    _
  // Predicated region
  $region10: #{a_call__.4} parent=0 // pred_check
    _
  $region11: #{a_call__.4} parent=0 // pred_check_branch
    %14 = sbr.rel (0) target = $region13
  $region12: #{a_call__.4} parent=0 // pred_region
    _
  $region13: #{a_call__.4} parent=0 // pred_fallthru
    _
  // Predicated region
  $region14: #{a_call__.4} parent=0 // pred_check
    _
  $region15: #{a_call__.4} parent=0 // pred_check_branch
    %16 = sbr.rel (0) target = $region17
  $region16: #{a_call__.4} parent=0 // pred_region
    _
  $region17: #{a_call__.4} parent=0 // pred_fallthru
    _
  %p18 = scmp.eq.s32.totalorder 0, 0
  // Predicated region
  $region18: #{a_call__.4} parent=0 // pred_check
    %p19 = pneg %p18
  $region19: #{a_call__.4} parent=0 // pred_check_branch
    %21 = sbr.rel (%p19) target = $region21
  $region20: #{a_call__.4} parent=0 // pred_region
    %vm22 = vcmask 58368
    %23 = vst.msk [vmem:[%s4] sm:$0x3] %vm22, 0.0
  $region21: #{a_call__.4} parent=0 // pred_fallthru
    _
  %v24 = vld [vmem:[%s0] sm:$0xf]
  %v25 = vld [vmem:[%s0 + $0x4] sm:$0xf]
  %v26 = vld [vmem:[%s0 + $0x8] sm:$0xf]
  %v27 = vld [vmem:[%s0 + $0xc] sm:$0xf]
  %v28 = vld [vmem:[%s0 + $0x10] sm:$0xf]
  %v29 = vld [vmem:[%s0 + $0x14] sm:$0xf]
  %v30 = vld [vmem:[%s0 + $0x18] sm:$0xf]
  %v31 = vld [vmem:[%s0 + $0x1c] sm:$0xf]
  %v32 = vld [vmem:[%s0 + $0x20] sm:$0xf]
  %v33 = vld [vmem:[%s0 + $0x24] sm:$0xf]
  %v34 = vld [vmem:[%s0 + $0x28] sm:$0xf]
  %v35 = vld [vmem:[%s0 + $0x2c] sm:$0xf]
  %v36 = vld [vmem:[%s0 + $0x30] sm:$0xf]
  %v37 = vld [vmem:[%s0 + $0x34] sm:$0xf]
  %v38 = vld [vmem:[%s0 + $0x38] sm:$0xf]
  %v39 = vld [vmem:[%s0 + $0x3c] sm:$0xf]
  %v40 = vld [vmem:[%s1] sm:$0xf]
  %v41 = vld [vmem:[%s1 + $0x4] sm:$0xf]
  %v42 = vld [vmem:[%s1 + $0x8] sm:$0xf]
  %v43 = vld [vmem:[%s1 + $0xc] sm:$0xf]
  %v44 = vld [vmem:[%s1 + $0x10] sm:$0x3]
  %v61 = vunpack.c.l.b16 %v24
  %v62 = vunpack.c.l.b16 %v25
  %v63 = vunpack.c.l.b16 %v26
  %v64 = vunpack.c.l.b16 %v27
  %v65 = vunpack.c.l.b16 %v28
  %v66 = vunpack.c.l.b16 %v29
  %v67 = vunpack.c.l.b16 %v30
  %v68 = vunpack.c.l.b16 %v31
  %v69 = vunpack.c.l.b16 %v32
  %v70 = vunpack.c.l.b16 %v33
  %v71 = vunpack.c.l.b16 %v34
  %v72 = vunpack.c.l.b16 %v35
  %v73 = vunpack.c.l.b16 %v36
  %v74 = vunpack.c.l.b16 %v37
  %v75 = vunpack.c.l.b16 %v38
  %v76 = vunpack.c.l.b16 %v39
  %v77 = vpack.c.b16 %v62, %v61
  %v78 = vpack.c.b16 %v64, %v63
  %v79 = vpack.c.b16 %v66, %v65
  %v80 = vpack.c.b16 %v68, %v67
  %v81 = vpack.c.b16 %v70, %v69
  %v82 = vpack.c.b16 %v72, %v71
  %v83 = vpack.c.b16 %v74, %v73
  %v84 = vpack.c.b16 %v76, %v75
  %v90 = vunpack.c.l.b16 %v40
  %v91 = vunpack.c.l.b16 %v41
  %v92 = vunpack.c.l.b16 %v42
  %v93 = vunpack.c.l.b16 %v43
  %v94 = vunpack.c.l.b16 %v44
  %v95 = vpack.c.b16 %v91, %v90
  %v96 = vpack.c.b16 %v93, %v92
  %v97 = vpack.c.b16 %v94, %v94
  %vm100 = vcmask 293888
  %v102 = vsel %vm100, %v77, 0
  %v105 = vsel %vm100, %v78, 0
  %v108 = vsel %vm100, %v79, 0
  %v111 = vsel %vm100, %v80, 0
  %v114 = vsel %vm100, %v81, 0
  %v117 = vsel %vm100, %v82, 0
  %v120 = vsel %vm100, %v83, 0
  %v123 = vsel %vm100, %v84, 0
  %vm125 = vcmask 1041408
  %v127 = vsel %vm125, %v97, 0
  %129 = vmatprep.subr.bf16.mxu0 0
  %130 = vmatpush1.bf16.msra.mxu0 %v95
  %131 = vmatprep.subr.bf16.mxu0 0
  %132 = vmatpush1.bf16.msra.mxu0 %v96
  %133 = vmatprep.subr.bf16.mxu0 0
  %134 = vmatpush1.bf16.msra.mxu0 %v127
  %135 = vmatprep.subr.bf16.mxu0 0
  %136 = vmatpush1.bf16.msra.mxu0 0
  %137 = vmatprep.subr.bf16.mxu0 0
  %138 = vmatpush1.bf16.msra.mxu0 0
  %139 = vmatprep.subr.bf16.mxu0 0
  %140 = vmatpush1.bf16.msra.mxu0 0
  %141 = vmatprep.subr.bf16.mxu0 0
  %142 = vmatpush1.bf16.msra.mxu0 0
  %143 = vmatprep.subr.bf16.mxu0 0
  %144 = vmatpush1.bf16.msra.mxu0 0
  %145 = vmatprep.subr.bf16.mxu0 0
  %146 = vmatpush1.bf16.msra.mxu0 0
  %147 = vmatprep.subr.bf16.mxu0 0
  %148 = vmatpush1.bf16.msra.mxu0 0
  %149 = vmatprep.subr.bf16.mxu0 0
  %150 = vmatpush1.bf16.msra.mxu0 0
  %151 = vmatprep.subr.bf16.mxu0 0
  %152 = vmatpush1.bf16.msra.mxu0 0
  %153 = vmatprep.subr.bf16.mxu0 0
  %154 = vmatpush1.bf16.msra.mxu0 0
  %155 = vmatprep.subr.bf16.mxu0 0
  %156 = vmatpush1.bf16.msra.mxu0 0
  %157 = vmatprep.subr.bf16.mxu0 0
  %158 = vmatpush1.bf16.msra.mxu0 0
  %159 = vmatprep.subr.bf16.mxu0 0
  %160 = vmatpush1.bf16.msra.mxu0 0
  %161 = vmatprep.mubr.bf16.mxu0 0
  %162 = vmatmul.mubr.bf16.gmra.mrb[0].mxu0 %v102
  %v163 = vpop.f32.mrb[0].mxu0
  %v164 = vadd.f32 0.0, %v163
  %v165 = vpop.f32.mrb[0].mxu0
  %v166 = vpop.f32.mrb[0].mxu0
  %v167 = vadd.f32 0.0, %v166
  %v168 = vpop.f32.mrb[0].mxu0
  %169 = vmatprep.mubr.bf16.mxu0 0
  %170 = vmatmul.mubr.bf16.gmra.mrb[0].mxu0 %v105
  %v171 = vpop.f32.mrb[0].mxu0
  %v172 = vadd.f32 0.0, %v171
  %v173 = vpop.f32.mrb[0].mxu0
  %v174 = vpop.f32.mrb[0].mxu0
  %v175 = vadd.f32 0.0, %v174
  %v176 = vpop.f32.mrb[0].mxu0
  %177 = vmatprep.mubr.bf16.mxu0 0
  %178 = vmatmul.mubr.bf16.gmra.mrb[0].mxu0 %v108
  %v179 = vpop.f32.mrb[0].mxu0
  %v180 = vadd.f32 0.0, %v179
  %v181 = vpop.f32.mrb[0].mxu0
  %v182 = vpop.f32.mrb[0].mxu0
  %v183 = vadd.f32 0.0, %v182
  %v184 = vpop.f32.mrb[0].mxu0
  %185 = vmatprep.mubr.bf16.mxu0 0
  %186 = vmatmul.mubr.bf16.gmra.mrb[0].mxu0 %v111
  %v187 = vpop.f32.mrb[0].mxu0
  %v188 = vadd.f32 0.0, %v187
  %v189 = vpop.f32.mrb[0].mxu0
  %v190 = vpop.f32.mrb[0].mxu0
  %v191 = vadd.f32 0.0, %v190
  %v192 = vpop.f32.mrb[0].mxu0
  %193 = vmatprep.mubr.bf16.mxu0 0
  %194 = vmatmul.mubr.bf16.gmra.mrb[0].mxu0 %v114
  %v195 = vpop.f32.mrb[0].mxu0
  %v196 = vadd.f32 0.0, %v195
  %v197 = vpop.f32.mrb[0].mxu0
  %v198 = vpop.f32.mrb[0].mxu0
  %v199 = vadd.f32 0.0, %v198
  %v200 = vpop.f32.mrb[0].mxu0
  %201 = vmatprep.mubr.bf16.mxu0 0
  %202 = vmatmul.mubr.bf16.gmra.mrb[0].mxu0 %v117
  %v203 = vpop.f32.mrb[0].mxu0
  %v204 = vadd.f32 0.0, %v203
  %v205 = vpop.f32.mrb[0].mxu0
  %v206 = vpop.f32.mrb[0].mxu0
  %v207 = vadd.f32 0.0, %v206
  %v208 = vpop.f32.mrb[0].mxu0
  %209 = vmatprep.mubr.bf16.mxu0 0
  %210 = vmatmul.mubr.bf16.gmra.mrb[0].mxu0 %v120
  %v211 = vpop.f32.mrb[0].mxu0
  %v212 = vadd.f32 0.0, %v211
  %v213 = vpop.f32.mrb[0].mxu0
  %v214 = vpop.f32.mrb[0].mxu0
  %v215 = vadd.f32 0.0, %v214
  %v216 = vpop.f32.mrb[0].mxu0
  %217 = vmatprep.mubr.bf16.mxu0 0
  %218 = vmatmul.mubr.bf16.gmra.mrb[0].mxu0 %v123
  %v219 = vpop.f32.mrb[0].mxu0
  %v220 = vadd.f32 0.0, %v219
  %v221 = vpop.f32.mrb[0].mxu0
  %v222 = vpop.f32.mrb[0].mxu0
  %v223 = vadd.f32 0.0, %v222
  %v224 = vpop.f32.mrb[0].mxu0
  %225 = vdwg.mxu0
  %vm226 = vcmask 64512
  %v227 = vsel %vm226, %v164, 0.0
  %v228 = vsel %vm226, %v167, 0.0
  %v229 = vadd.f32 %v227, %v228
  %v230 = vsel %vm226, %v172, 0.0
  %v231 = vadd.f32 %v229, %v230
  %v232 = vsel %vm226, %v175, 0.0
  %v233 = vadd.f32 %v231, %v232
  %v234 = vsel %vm226, %v180, 0.0
  %v235 = vadd.f32 %v233, %v234
  %v236 = vsel %vm226, %v183, 0.0
  %v237 = vadd.f32 %v235, %v236
  %v238 = vsel %vm226, %v188, 0.0
  %v239 = vadd.f32 %v237, %v238
  %v240 = vsel %vm226, %v191, 0.0
  %v241 = vadd.f32 %v239, %v240
  %v242 = vsel %vm226, %v196, 0.0
  %v243 = vadd.f32 %v241, %v242
  %v244 = vsel %vm226, %v199, 0.0
  %v245 = vadd.f32 %v243, %v244
  %v246 = vsel %vm226, %v204, 0.0
  %v247 = vadd.f32 %v245, %v246
  %v248 = vsel %vm226, %v207, 0.0
  %v249 = vadd.f32 %v247, %v248
  %v250 = vsel %vm226, %v212, 0.0
  %v251 = vadd.f32 %v249, %v250
  %v252 = vsel %vm226, %v215, 0.0
  %v253 = vadd.f32 %v251, %v252
  %v254 = vsel %vm226, %v220, 0.0
  %v255 = vadd.f32 %v253, %v254
  %v256 = vsel %vm226, %v223, 0.0
  %v257 = vadd.f32 %v255, %v256
  %v258 = vrot.slane %v257, 4
  %v259 = vadd.f32 %v257, %v258
  %v260 = vrot.slane %v259, 2
  %v261 = vadd.f32 %v259, %v260
  %v262 = vrot.slane %v261, 1
  %v263 = vadd.f32 %v261, %v262
  %v264 = vmul.f32 %v164, %v164
  %v265 = vmul.f32 %v167, %v167
  %v266 = vmul.f32 %v172, %v172
  %v267 = vmul.f32 %v175, %v175
  %v268 = vmul.f32 %v180, %v180
  %v269 = vmul.f32 %v183, %v183
  %v270 = vmul.f32 %v188, %v188
  %v271 = vmul.f32 %v191, %v191
  %v272 = vmul.f32 %v196, %v196
  %v273 = vmul.f32 %v199, %v199
  %v274 = vmul.f32 %v204, %v204
  %v275 = vmul.f32 %v207, %v207
  %v276 = vmul.f32 %v212, %v212
  %v277 = vmul.f32 %v215, %v215
  %v278 = vmul.f32 %v220, %v220
  %v279 = vmul.f32 %v223, %v223
  %v280 = vsel %vm226, %v264, 0.0
  %v281 = vsel %vm226, %v265, 0.0
  %v282 = vadd.f32 %v280, %v281
  %v283 = vsel %vm226, %v266, 0.0
  %v284 = vadd.f32 %v282, %v283
  %v285 = vsel %vm226, %v267, 0.0
  %v286 = vadd.f32 %v284, %v285
  %v287 = vsel %vm226, %v268, 0.0
  %v288 = vadd.f32 %v286, %v287
  %v289 = vsel %vm226, %v269, 0.0
  %v290 = vadd.f32 %v288, %v289
  %v291 = vsel %vm226, %v270, 0.0
  %v292 = vadd.f32 %v290, %v291
  %v293 = vsel %vm226, %v271, 0.0
  %v294 = vadd.f32 %v292, %v293
  %v295 = vsel %vm226, %v272, 0.0
  %v296 = vadd.f32 %v294, %v295
  %v297 = vsel %vm226, %v273, 0.0
  %v298 = vadd.f32 %v296, %v297
  %v299 = vsel %vm226, %v274, 0.0
  %v300 = vadd.f32 %v298, %v299
  %v301 = vsel %vm226, %v275, 0.0
  %v302 = vadd.f32 %v300, %v301
  %v303 = vsel %vm226, %v276, 0.0
  %v304 = vadd.f32 %v302, %v303
  %v305 = vsel %vm226, %v277, 0.0
  %v306 = vadd.f32 %v304, %v305
  %v307 = vsel %vm226, %v278, 0.0
  %v308 = vadd.f32 %v306, %v307
  %v309 = vsel %vm226, %v279, 0.0
  %v310 = vadd.f32 %v308, %v309
  %v311 = vrot.slane %v310, 4
  %v312 = vadd.f32 %v310, %v311
  %v313 = vrot.slane %v312, 2
  %v314 = vadd.f32 %v312, %v313
  %v315 = vrot.slane %v314, 1
  %v316 = vadd.f32 %v314, %v315
  %vm317 = vcmask 1040384
  %v318 = vsel %vm317, %v263, %v316
  %v319 = vld [vmem:[%s4] sm:$0x3]
  %v320 = vadd.f32 %v319, %v318
  %vm321 = vcmask 58368
  %322 = vst.msk [vmem:[%s4] sm:$0x3] %vm321, %v320
  // Predicated region
  $region22: #{a_call__.4} parent=0 // pred_check
    %p323 = pneg %p18
  $region23: #{a_call__.4} parent=0 // pred_check_branch
    %325 = sbr.rel (%p323) target = $region25
  $region24: #{a_call__.4} parent=0 // pred_region
    %v326 = vld [vmem:[%s4] sm:$0x3]
    %v327 = vmul.f32 %v326, 0.0078125
    %v328 = vmul.f32 %v327, %v327
    %v330 = vrot.slane %v328, 7
    %v332 = vsub.f32 %v327, %v330
    %v333 = vld [vmem:[%s2] sm:$0x1]
    %v334 = vadd.f32 %v332, 1e-05
    %v335 = vrsqrt.pop %v334
    %v338 = vunpack.c.l.s4 1966171168
    %v339 = vunpack.c.0.s8 %v338
    %v340 = vlaneseq
    %v341 = vshrl.u32 %v340, 7
    %v342 = vsub.s32 %v339, %v341
    %v343 = vrot.slane %v335, %v342
    %v344 = vcombine.high %v343, %v343
    %v346 = vunpack.c.l.s4 1966171168
    %v347 = vunpack.c.0.s8 %v346
    %v348 = vlaneseq
    %v349 = vshrl.u32 %v348, 7
    %v350 = vsub.s32 %v347, %v349
    %v351 = vrot.slane %v344, %v350
    %v353 = vmul.f32 %v333, %v351
    %v354 = vld [vmem:[%s3] sm:$0x1]
    %v355 = vmul.f32 %v327, %v353
    %v356 = vsub.f32 %v354, %v355
    %v358 = vlaneseq
    %v359 = vshrl.u32 %v358, 7
    %v360 = vsub.s32 0, %v359
    %v361 = vrot.slane %v356, %v360
    %v363 = vsel %vm317, %v353, %v361
    %364 = vst.msk [vmem:[%s4] sm:$0x3] %vm321, %v363
  $region25: #{a_call__.4} parent=0 // pred_fallthru
    _
  // Predicated region
  $region26: #{a_call__.4} parent=0 // pred_check
    _
  $region27: #{a_call__.4} parent=0 // pred_check_branch
    %366 = sbr.rel (0) target = $region29
  $region28: #{a_call__.4} parent=0 // pred_region
    _
  $region29: #{a_call__.4} parent=0 // pred_fallthru
    _
  // Predicated region
  $region30: #{a_call__.4} parent=0 // pred_check
    _
  $region31: #{a_call__.4} parent=0 // pred_check_branch
    %368 = sbr.rel (0) target = $region33
  $region32: #{a_call__.4} parent=0 // pred_region
    _
  $region33: #{a_call__.4} parent=0 // pred_fallthru
    _

// kernel: a_call__.7
$region0: #{a_call__.7}
  #allocation0 [shape = 'u32[]', space=smem, size = 0x4, offset = 0x4, fixed_abs, tag = 'smem constant byte address 0x4 - core index']
  #allocation1 [shape = 'u32[144,128]{1,0:T(1,128)}', space=vmem, size = 0x12000, scoped, tag = 'internal scratch']
  %s0 = inlined_call_operand.vmem [shape: bf16[128,72], index: 0, kind: input, shape index: {}]
  %s1 = inlined_call_operand.vmem [shape: bf16[72,8], index: 1, kind: input, shape index: {}]
  %s2 = inlined_call_operand.vmem [shape: f32[2,8], index: 2, kind: input, shape index: {}]
  %s3 = inlined_call_operand.vmem [shape: f32[128,8], index: 3, kind: output, shape index: {}]
  %s4 = sld [smem:[#allocation0]]
  $region22: #{a_call__.7} parent=0
    _
  %s6 = ssub.s32 1, %s4
  %s7 = scalar_select 0, %s6, %s4
  // Predicated region
  $region2: #{a_call__.7} parent=0 // pred_check
    _
  $region3: #{a_call__.7} parent=0 // pred_check_branch
    %9 = sbr.rel (0) target = $region5
  $region4: #{a_call__.7} parent=0 // pred_region
    _
  $region5: #{a_call__.7} parent=0 // pred_fallthru
    _
  // Predicated region
  $region6: #{a_call__.7} parent=0 // pred_check
    _
  $region7: #{a_call__.7} parent=0 // pred_check_branch
    %11 = sbr.rel (0) target = $region9
  $region8: #{a_call__.7} parent=0 // pred_region
    _
  $region9: #{a_call__.7} parent=0 // pred_fallthru
    _
  // Predicated region
  $region10: #{a_call__.7} parent=0 // pred_check
    _
  $region11: #{a_call__.7} parent=0 // pred_check_branch
    %13 = sbr.rel (0) target = $region13
  $region12: #{a_call__.7} parent=0 // pred_region
    _
  $region13: #{a_call__.7} parent=0 // pred_fallthru
    _
  %v15 = vld [vmem:[%s0] sm:$0xf]
  %v16 = vld [vmem:[%s0 + $0x4] sm:$0xf]
  %v17 = vld [vmem:[%s0 + $0x8] sm:$0xf]
  %v18 = vld [vmem:[%s0 + $0xc] sm:$0xf]
  %v19 = vld [vmem:[%s0 + $0x10] sm:$0xf]
  %v20 = vld [vmem:[%s0 + $0x14] sm:$0xf]
  %v21 = vld [vmem:[%s0 + $0x18] sm:$0xf]
  %v22 = vld [vmem:[%s0 + $0x1c] sm:$0xf]
  %v23 = vld [vmem:[%s0 + $0x20] sm:$0xf]
  %v24 = vld [vmem:[%s0 + $0x24] sm:$0xf]
  %v25 = vld [vmem:[%s0 + $0x28] sm:$0xf]
  %v26 = vld [vmem:[%s0 + $0x2c] sm:$0xf]
  %v27 = vld [vmem:[%s0 + $0x30] sm:$0xf]
  %v28 = vld [vmem:[%s0 + $0x34] sm:$0xf]
  %v29 = vld [vmem:[%s0 + $0x38] sm:$0xf]
  %v30 = vld [vmem:[%s0 + $0x3c] sm:$0xf]
  %v31 = vld [vmem:[%s1] sm:$0xf]
  %v32 = vld [vmem:[%s1 + $0x4] sm:$0xf]
  %v33 = vld [vmem:[%s1 + $0x8] sm:$0xf]
  %v34 = vld [vmem:[%s1 + $0xc] sm:$0xf]
  %v35 = vld [vmem:[%s1 + $0x10] sm:$0xf]
  %v36 = vld [vmem:[%s1 + $0x14] sm:$0xf]
  %v37 = vld [vmem:[%s1 + $0x18] sm:$0xf]
  %v38 = vld [vmem:[%s1 + $0x1c] sm:$0xf]
  %v39 = vld [vmem:[%s1 + $0x20] sm:$0xf]
  %v56 = vunpack.c.l.b16 %v15
  %v57 = vunpack.c.l.b16 %v16
  %v58 = vunpack.c.l.b16 %v17
  %v59 = vunpack.c.l.b16 %v18
  %v60 = vunpack.c.l.b16 %v19
  %v61 = vunpack.c.l.b16 %v20
  %v62 = vunpack.c.l.b16 %v21
  %v63 = vunpack.c.l.b16 %v22
  %v64 = vunpack.c.l.b16 %v23
  %v65 = vunpack.c.l.b16 %v24
  %v66 = vunpack.c.l.b16 %v25
  %v67 = vunpack.c.l.b16 %v26
  %v68 = vunpack.c.l.b16 %v27
  %v69 = vunpack.c.l.b16 %v28
  %v70 = vunpack.c.l.b16 %v29
  %v71 = vunpack.c.l.b16 %v30
  %v72 = vpack.c.b16 %v57, %v56
  %v73 = vpack.c.b16 %v59, %v58
  %v74 = vpack.c.b16 %v61, %v60
  %v75 = vpack.c.b16 %v63, %v62
  %v76 = vpack.c.b16 %v65, %v64
  %v77 = vpack.c.b16 %v67, %v66
  %v78 = vpack.c.b16 %v69, %v68
  %v79 = vpack.c.b16 %v71, %v70
  %v89 = vunpack.c.l.b16 %v31
  %v90 = vunpack.c.l.b16 %v32
  %v91 = vunpack.c.l.b16 %v33
  %v92 = vunpack.c.l.b16 %v34
  %v93 = vunpack.c.l.b16 %v35
  %v94 = vunpack.c.l.b16 %v36
  %v95 = vunpack.c.l.b16 %v37
  %v96 = vunpack.c.l.b16 %v38
  %v97 = vunpack.c.l.b16 %v39
  %v98 = vpack.c.b16 %v90, %v89
  %v99 = vpack.c.b16 %v92, %v91
  %v100 = vpack.c.b16 %v94, %v93
  %v101 = vpack.c.b16 %v96, %v95
  %v102 = vpack.c.b16 %v97, %v97
  %vm107 = vcmask 588800
  %v109 = vsel %vm107, %v72, 0
  %v112 = vsel %vm107, %v73, 0
  %v115 = vsel %vm107, %v74, 0
  %v118 = vsel %vm107, %v75, 0
  %v121 = vsel %vm107, %v76, 0
  %v124 = vsel %vm107, %v77, 0
  %v127 = vsel %vm107, %v78, 0
  %v130 = vsel %vm107, %v79, 0
  %vm132 = vcmask 1043456
  %v134 = vsel %vm132, %v102, 0
  %136 = vmatprep.subr.bf16.mxu0 0
  %137 = vmatpush1.bf16.msra.mxu0 %v98
  %138 = vmatprep.subr.bf16.mxu0 0
  %139 = vmatpush1.bf16.msra.mxu0 %v99
  %140 = vmatprep.subr.bf16.mxu0 0
  %141 = vmatpush1.bf16.msra.mxu0 %v100
  %142 = vmatprep.subr.bf16.mxu0 0
  %143 = vmatpush1.bf16.msra.mxu0 %v101
  %144 = vmatprep.subr.bf16.mxu0 0
  %145 = vmatpush1.bf16.msra.mxu0 %v134
  %146 = vmatprep.subr.bf16.mxu0 0
  %147 = vmatpush1.bf16.msra.mxu0 0
  %148 = vmatprep.subr.bf16.mxu0 0
  %149 = vmatpush1.bf16.msra.mxu0 0
  %150 = vmatprep.subr.bf16.mxu0 0
  %151 = vmatpush1.bf16.msra.mxu0 0
  %152 = vmatprep.subr.bf16.mxu0 0
  %153 = vmatpush1.bf16.msra.mxu0 0
  %154 = vmatprep.subr.bf16.mxu0 0
  %155 = vmatpush1.bf16.msra.mxu0 0
  %156 = vmatprep.subr.bf16.mxu0 0
  %157 = vmatpush1.bf16.msra.mxu0 0
  %158 = vmatprep.subr.bf16.mxu0 0
  %159 = vmatpush1.bf16.msra.mxu0 0
  %160 = vmatprep.subr.bf16.mxu0 0
  %161 = vmatpush1.bf16.msra.mxu0 0
  %162 = vmatprep.subr.bf16.mxu0 0
  %163 = vmatpush1.bf16.msra.mxu0 0
  %164 = vmatprep.subr.bf16.mxu0 0
  %165 = vmatpush1.bf16.msra.mxu0 0
  %166 = vmatprep.subr.bf16.mxu0 0
  %167 = vmatpush1.bf16.msra.mxu0 0
  %168 = vmatprep.mubr.bf16.mxu0 0
  %169 = vmatmul.mubr.bf16.gmra.mrb[0].mxu0 %v109
  %v170 = vpop.f32.mrb[0].mxu0
  %v171 = vadd.f32 0.0, %v170
  %v172 = vpop.f32.mrb[0].mxu0
  %v173 = vpop.f32.mrb[0].mxu0
  %v174 = vadd.f32 0.0, %v173
  %v175 = vpop.f32.mrb[0].mxu0
  %176 = vmatprep.mubr.bf16.mxu0 0
  %177 = vmatmul.mubr.bf16.gmra.mrb[0].mxu0 %v112
  %v178 = vpop.f32.mrb[0].mxu0
  %v179 = vadd.f32 0.0, %v178
  %v180 = vpop.f32.mrb[0].mxu0
  %v181 = vpop.f32.mrb[0].mxu0
  %v182 = vadd.f32 0.0, %v181
  %v183 = vpop.f32.mrb[0].mxu0
  %184 = vmatprep.mubr.bf16.mxu0 0
  %185 = vmatmul.mubr.bf16.gmra.mrb[0].mxu0 %v115
  %v186 = vpop.f32.mrb[0].mxu0
  %v187 = vadd.f32 0.0, %v186
  %v188 = vpop.f32.mrb[0].mxu0
  %v189 = vpop.f32.mrb[0].mxu0
  %v190 = vadd.f32 0.0, %v189
  %v191 = vpop.f32.mrb[0].mxu0
  %192 = vmatprep.mubr.bf16.mxu0 0
  %193 = vmatmul.mubr.bf16.gmra.mrb[0].mxu0 %v118
  %v194 = vpop.f32.mrb[0].mxu0
  %v195 = vadd.f32 0.0, %v194
  %v196 = vpop.f32.mrb[0].mxu0
  %v197 = vpop.f32.mrb[0].mxu0
  %v198 = vadd.f32 0.0, %v197
  %v199 = vpop.f32.mrb[0].mxu0
  %200 = vmatprep.mubr.bf16.mxu0 0
  %201 = vmatmul.mubr.bf16.gmra.mrb[0].mxu0 %v121
  %v202 = vpop.f32.mrb[0].mxu0
  %v203 = vadd.f32 0.0, %v202
  %v204 = vpop.f32.mrb[0].mxu0
  %v205 = vpop.f32.mrb[0].mxu0
  %v206 = vadd.f32 0.0, %v205
  %v207 = vpop.f32.mrb[0].mxu0
  %208 = vmatprep.mubr.bf16.mxu0 0
  %209 = vmatmul.mubr.bf16.gmra.mrb[0].mxu0 %v124
  %v210 = vpop.f32.mrb[0].mxu0
  %v211 = vadd.f32 0.0, %v210
  %v212 = vpop.f32.mrb[0].mxu0
  %v213 = vpop.f32.mrb[0].mxu0
  %v214 = vadd.f32 0.0, %v213
  %v215 = vpop.f32.mrb[0].mxu0
  %216 = vmatprep.mubr.bf16.mxu0 0
  %217 = vmatmul.mubr.bf16.gmra.mrb[0].mxu0 %v127
  %v218 = vpop.f32.mrb[0].mxu0
  %v219 = vadd.f32 0.0, %v218
  %v220 = vpop.f32.mrb[0].mxu0
  %v221 = vpop.f32.mrb[0].mxu0
  %v222 = vadd.f32 0.0, %v221
  %v223 = vpop.f32.mrb[0].mxu0
  %224 = vmatprep.mubr.bf16.mxu0 0
  %225 = vmatmul.mubr.bf16.gmra.mrb[0].mxu0 %v130
  %v226 = vpop.f32.mrb[0].mxu0
  %v227 = vadd.f32 0.0, %v226
  %v228 = vpop.f32.mrb[0].mxu0
  %v229 = vpop.f32.mrb[0].mxu0
  %v230 = vadd.f32 0.0, %v229
  %v231 = vpop.f32.mrb[0].mxu0
  %232 = vdwg.mxu0
  %v233 = vld [vmem:[%s2] sm:$0x1]
  %v234 = vld [vmem:[%s2 + $0x1] sm:$0x1]
  %v235 = vlaneseq
  %v236 = vshrl.u32 %v235, 7
  %v237 = vsub.s32 0, %v236
  %v238 = vrot.slane %v233, %v237
  %v239 = vmul.f32 %v171, %v238
  %v240 = vmul.f32 %v174, %v238
  %v241 = vmul.f32 %v179, %v238
  %v242 = vmul.f32 %v182, %v238
  %v243 = vmul.f32 %v187, %v238
  %v244 = vmul.f32 %v190, %v238
  %v245 = vmul.f32 %v195, %v238
  %v246 = vmul.f32 %v198, %v238
  %v247 = vmul.f32 %v203, %v238
  %v248 = vmul.f32 %v206, %v238
  %v249 = vmul.f32 %v211, %v238
  %v250 = vmul.f32 %v214, %v238
  %v251 = vmul.f32 %v219, %v238
  %v252 = vmul.f32 %v222, %v238
  %v253 = vmul.f32 %v227, %v238
  %v254 = vmul.f32 %v230, %v238
  %v255 = vlaneseq
  %v256 = vshrl.u32 %v255, 7
  %v257 = vsub.s32 0, %v256
  %v258 = vrot.slane %v234, %v257
  %v259 = vadd.f32 %v239, %v258
  %v260 = vadd.f32 %v240, %v258
  %v261 = vadd.f32 %v241, %v258
  %v262 = vadd.f32 %v242, %v258
  %v263 = vadd.f32 %v243, %v258
  %v264 = vadd.f32 %v244, %v258
  %v265 = vadd.f32 %v245, %v258
  %v266 = vadd.f32 %v246, %v258
  %v267 = vadd.f32 %v247, %v258
  %v268 = vadd.f32 %v248, %v258
  %v269 = vadd.f32 %v249, %v258
  %v270 = vadd.f32 %v250, %v258
  %v271 = vadd.f32 %v251, %v258
  %v272 = vadd.f32 %v252, %v258
  %v273 = vadd.f32 %v253, %v258
  %v274 = vadd.f32 %v254, %v258
  %v275 = vmax.f32 %v259, 0.0
  %v276 = vmax.f32 %v260, 0.0
  %v277 = vmax.f32 %v261, 0.0
  %v278 = vmax.f32 %v262, 0.0
  %v279 = vmax.f32 %v263, 0.0
  %v280 = vmax.f32 %v264, 0.0
  %v281 = vmax.f32 %v265, 0.0
  %v282 = vmax.f32 %v266, 0.0
  %v283 = vmax.f32 %v267, 0.0
  %v284 = vmax.f32 %v268, 0.0
  %v285 = vmax.f32 %v269, 0.0
  %v286 = vmax.f32 %v270, 0.0
  %v287 = vmax.f32 %v271, 0.0
  %v288 = vmax.f32 %v272, 0.0
  %v289 = vmax.f32 %v273, 0.0
  %v290 = vmax.f32 %v274, 0.0
  %vm291 = vcmask 64512
  %292 = vst.msk [vmem:[%s3] sm:$0xff] %vm291, %v275
  %293 = vst.msk [vmem:[%s3 + $0x8] sm:$0xff] %vm291, %v276
  %294 = vst.msk [vmem:[%s3 + $0x10] sm:$0xff] %vm291, %v277
  %295 = vst.msk [vmem:[%s3 + $0x18] sm:$0xff] %vm291, %v278
  %296 = vst.msk [vmem:[%s3 + $0x20] sm:$0xff] %vm291, %v279
  %297 = vst.msk [vmem:[%s3 + $0x28] sm:$0xff] %vm291, %v280
  %298 = vst.msk [vmem:[%s3 + $0x30] sm:$0xff] %vm291, %v281
  %299 = vst.msk [vmem:[%s3 + $0x38] sm:$0xff] %vm291, %v282
  %300 = vst.msk [vmem:[%s3 + $0x40] sm:$0xff] %vm291, %v283
  %301 = vst.msk [vmem:[%s3 + $0x48] sm:$0xff] %vm291, %v284
  %302 = vst.msk [vmem:[%s3 + $0x50] sm:$0xff] %vm291, %v285
  %303 = vst.msk [vmem:[%s3 + $0x58] sm:$0xff] %vm291, %v286
  %304 = vst.msk [vmem:[%s3 + $0x60] sm:$0xff] %vm291, %v287
  %305 = vst.msk [vmem:[%s3 + $0x68] sm:$0xff] %vm291, %v288
  %306 = vst.msk [vmem:[%s3 + $0x70] sm:$0xff] %vm291, %v289
  %307 = vst.msk [vmem:[%s3 + $0x78] sm:$0xff] %vm291, %v290
  // Predicated region
  $region14: #{a_call__.7} parent=0 // pred_check
    _
  $region15: #{a_call__.7} parent=0 // pred_check_branch
    %309 = sbr.rel (0) target = $region17
  $region16: #{a_call__.7} parent=0 // pred_region
    _
  $region17: #{a_call__.7} parent=0 // pred_fallthru
    _
  // Predicated region
  $region18: #{a_call__.7} parent=0 // pred_check
    _
  $region19: #{a_call__.7} parent=0 // pred_check_branch
    %311 = sbr.rel (0) target = $region21
  $region20: #{a_call__.7} parent=0 // pred_region
    _
  $region21: #{a_call__.7} parent=0 // pred_fallthru
    _

// kernel: a_call__.6
$region0: #{a_call__.6}
  #allocation0 [shape = 'u32[]', space=smem, size = 0x4, offset = 0x4, fixed_abs, tag = 'smem constant byte address 0x4 - core index']
  #allocation1 [shape = 'u32[144,128]{1,0:T(1,128)}', space=vmem, size = 0x12000, scoped, tag = 'internal scratch']
  %s0 = inlined_call_operand.vmem [shape: bf16[128,72], index: 0, kind: input, shape index: {}]
  %s1 = inlined_call_operand.vmem [shape: bf16[72,8], index: 1, kind: input, shape index: {}]
  %s2 = inlined_call_operand.vmem [shape: f32[1,8], index: 2, kind: input, shape index: {}]
  %s3 = inlined_call_operand.vmem [shape: f32[1,8], index: 3, kind: input, shape index: {}]
  %s4 = inlined_call_operand.vmem [shape: f32[2,8], index: 4, kind: output, shape index: {}]
  %s5 = sld [smem:[#allocation0]]
  $region34: #{a_call__.6} parent=0
    _
  %s7 = ssub.s32 1, %s5
  %s8 = scalar_select 0, %s7, %s5
  // Predicated region
  $region2: #{a_call__.6} parent=0 // pred_check
    _
  $region3: #{a_call__.6} parent=0 // pred_check_branch
    %10 = sbr.rel (0) target = $region5
  $region4: #{a_call__.6} parent=0 // pred_region
    _
  $region5: #{a_call__.6} parent=0 // pred_fallthru
    _
  // Predicated region
  $region6: #{a_call__.6} parent=0 // pred_check
    _
  $region7: #{a_call__.6} parent=0 // pred_check_branch
    %12 = sbr.rel (0) target = $region9
  $region8: #{a_call__.6} parent=0 // pred_region
    _
  $region9: #{a_call__.6} parent=0 // pred_fallthru
    _
  // Predicated region
  $region10: #{a_call__.6} parent=0 // pred_check
    _
  $region11: #{a_call__.6} parent=0 // pred_check_branch
    %14 = sbr.rel (0) target = $region13
  $region12: #{a_call__.6} parent=0 // pred_region
    _
  $region13: #{a_call__.6} parent=0 // pred_fallthru
    _
  // Predicated region
  $region14: #{a_call__.6} parent=0 // pred_check
    _
  $region15: #{a_call__.6} parent=0 // pred_check_branch
    %16 = sbr.rel (0) target = $region17
  $region16: #{a_call__.6} parent=0 // pred_region
    _
  $region17: #{a_call__.6} parent=0 // pred_fallthru
    _
  %p18 = scmp.eq.s32.totalorder 0, 0
  // Predicated region
  $region18: #{a_call__.6} parent=0 // pred_check
    %p19 = pneg %p18
  $region19: #{a_call__.6} parent=0 // pred_check_branch
    %21 = sbr.rel (%p19) target = $region21
  $region20: #{a_call__.6} parent=0 // pred_region
    %vm22 = vcmask 58368
    %23 = vst.msk [vmem:[%s4] sm:$0x3] %vm22, 0.0
  $region21: #{a_call__.6} parent=0 // pred_fallthru
    _
  %v24 = vld [vmem:[%s0] sm:$0xf]
  %v25 = vld [vmem:[%s0 + $0x4] sm:$0xf]
  %v26 = vld [vmem:[%s0 + $0x8] sm:$0xf]
  %v27 = vld [vmem:[%s0 + $0xc] sm:$0xf]
  %v28 = vld [vmem:[%s0 + $0x10] sm:$0xf]
  %v29 = vld [vmem:[%s0 + $0x14] sm:$0xf]
  %v30 = vld [vmem:[%s0 + $0x18] sm:$0xf]
  %v31 = vld [vmem:[%s0 + $0x1c] sm:$0xf]
  %v32 = vld [vmem:[%s0 + $0x20] sm:$0xf]
  %v33 = vld [vmem:[%s0 + $0x24] sm:$0xf]
  %v34 = vld [vmem:[%s0 + $0x28] sm:$0xf]
  %v35 = vld [vmem:[%s0 + $0x2c] sm:$0xf]
  %v36 = vld [vmem:[%s0 + $0x30] sm:$0xf]
  %v37 = vld [vmem:[%s0 + $0x34] sm:$0xf]
  %v38 = vld [vmem:[%s0 + $0x38] sm:$0xf]
  %v39 = vld [vmem:[%s0 + $0x3c] sm:$0xf]
  %v40 = vld [vmem:[%s1] sm:$0xf]
  %v41 = vld [vmem:[%s1 + $0x4] sm:$0xf]
  %v42 = vld [vmem:[%s1 + $0x8] sm:$0xf]
  %v43 = vld [vmem:[%s1 + $0xc] sm:$0xf]
  %v44 = vld [vmem:[%s1 + $0x10] sm:$0xf]
  %v45 = vld [vmem:[%s1 + $0x14] sm:$0xf]
  %v46 = vld [vmem:[%s1 + $0x18] sm:$0xf]
  %v47 = vld [vmem:[%s1 + $0x1c] sm:$0xf]
  %v48 = vld [vmem:[%s1 + $0x20] sm:$0xf]
  %v65 = vunpack.c.l.b16 %v24
  %v66 = vunpack.c.l.b16 %v25
  %v67 = vunpack.c.l.b16 %v26
  %v68 = vunpack.c.l.b16 %v27
  %v69 = vunpack.c.l.b16 %v28
  %v70 = vunpack.c.l.b16 %v29
  %v71 = vunpack.c.l.b16 %v30
  %v72 = vunpack.c.l.b16 %v31
  %v73 = vunpack.c.l.b16 %v32
  %v74 = vunpack.c.l.b16 %v33
  %v75 = vunpack.c.l.b16 %v34
  %v76 = vunpack.c.l.b16 %v35
  %v77 = vunpack.c.l.b16 %v36
  %v78 = vunpack.c.l.b16 %v37
  %v79 = vunpack.c.l.b16 %v38
  %v80 = vunpack.c.l.b16 %v39
  %v81 = vpack.c.b16 %v66, %v65
  %v82 = vpack.c.b16 %v68, %v67
  %v83 = vpack.c.b16 %v70, %v69
  %v84 = vpack.c.b16 %v72, %v71
  %v85 = vpack.c.b16 %v74, %v73
  %v86 = vpack.c.b16 %v76, %v75
  %v87 = vpack.c.b16 %v78, %v77
  %v88 = vpack.c.b16 %v80, %v79
  %v98 = vunpack.c.l.b16 %v40
  %v99 = vunpack.c.l.b16 %v41
  %v100 = vunpack.c.l.b16 %v42
  %v101 = vunpack.c.l.b16 %v43
  %v102 = vunpack.c.l.b16 %v44
  %v103 = vunpack.c.l.b16 %v45
  %v104 = vunpack.c.l.b16 %v46
  %v105 = vunpack.c.l.b16 %v47
  %v106 = vunpack.c.l.b16 %v48
  %v107 = vpack.c.b16 %v99, %v98
  %v108 = vpack.c.b16 %v101, %v100
  %v109 = vpack.c.b16 %v103, %v102
  %v110 = vpack.c.b16 %v105, %v104
  %v111 = vpack.c.b16 %v106, %v106
  %vm116 = vcmask 588800
  %v118 = vsel %vm116, %v81, 0
  %v121 = vsel %vm116, %v82, 0
  %v124 = vsel %vm116, %v83, 0
  %v127 = vsel %vm116, %v84, 0
  %v130 = vsel %vm116, %v85, 0
  %v133 = vsel %vm116, %v86, 0
  %v136 = vsel %vm116, %v87, 0
  %v139 = vsel %vm116, %v88, 0
  %vm141 = vcmask 1043456
  %v143 = vsel %vm141, %v111, 0
  %145 = vmatprep.subr.bf16.mxu0 0
  %146 = vmatpush1.bf16.msra.mxu0 %v107
  %147 = vmatprep.subr.bf16.mxu0 0
  %148 = vmatpush1.bf16.msra.mxu0 %v108
  %149 = vmatprep.subr.bf16.mxu0 0
  %150 = vmatpush1.bf16.msra.mxu0 %v109
  %151 = vmatprep.subr.bf16.mxu0 0
  %152 = vmatpush1.bf16.msra.mxu0 %v110
  %153 = vmatprep.subr.bf16.mxu0 0
  %154 = vmatpush1.bf16.msra.mxu0 %v143
  %155 = vmatprep.subr.bf16.mxu0 0
  %156 = vmatpush1.bf16.msra.mxu0 0
  %157 = vmatprep.subr.bf16.mxu0 0
  %158 = vmatpush1.bf16.msra.mxu0 0
  %159 = vmatprep.subr.bf16.mxu0 0
  %160 = vmatpush1.bf16.msra.mxu0 0
  %161 = vmatprep.subr.bf16.mxu0 0
  %162 = vmatpush1.bf16.msra.mxu0 0
  %163 = vmatprep.subr.bf16.mxu0 0
  %164 = vmatpush1.bf16.msra.mxu0 0
  %165 = vmatprep.subr.bf16.mxu0 0
  %166 = vmatpush1.bf16.msra.mxu0 0
  %167 = vmatprep.subr.bf16.mxu0 0
  %168 = vmatpush1.bf16.msra.mxu0 0
  %169 = vmatprep.subr.bf16.mxu0 0
  %170 = vmatpush1.bf16.msra.mxu0 0
  %171 = vmatprep.subr.bf16.mxu0 0
  %172 = vmatpush1.bf16.msra.mxu0 0
  %173 = vmatprep.subr.bf16.mxu0 0
  %174 = vmatpush1.bf16.msra.mxu0 0
  %175 = vmatprep.subr.bf16.mxu0 0
  %176 = vmatpush1.bf16.msra.mxu0 0
  %177 = vmatprep.mubr.bf16.mxu0 0
  %178 = vmatmul.mubr.bf16.gmra.mrb[0].mxu0 %v118
  %v179 = vpop.f32.mrb[0].mxu0
  %v180 = vadd.f32 0.0, %v179
  %v181 = vpop.f32.mrb[0].mxu0
  %v182 = vpop.f32.mrb[0].mxu0
  %v183 = vadd.f32 0.0, %v182
  %v184 = vpop.f32.mrb[0].mxu0
  %185 = vmatprep.mubr.bf16.mxu0 0
  %186 = vmatmul.mubr.bf16.gmra.mrb[0].mxu0 %v121
  %v187 = vpop.f32.mrb[0].mxu0
  %v188 = vadd.f32 0.0, %v187
  %v189 = vpop.f32.mrb[0].mxu0
  %v190 = vpop.f32.mrb[0].mxu0
  %v191 = vadd.f32 0.0, %v190
  %v192 = vpop.f32.mrb[0].mxu0
  %193 = vmatprep.mubr.bf16.mxu0 0
  %194 = vmatmul.mubr.bf16.gmra.mrb[0].mxu0 %v124
  %v195 = vpop.f32.mrb[0].mxu0
  %v196 = vadd.f32 0.0, %v195
  %v197 = vpop.f32.mrb[0].mxu0
  %v198 = vpop.f32.mrb[0].mxu0
  %v199 = vadd.f32 0.0, %v198
  %v200 = vpop.f32.mrb[0].mxu0
  %201 = vmatprep.mubr.bf16.mxu0 0
  %202 = vmatmul.mubr.bf16.gmra.mrb[0].mxu0 %v127
  %v203 = vpop.f32.mrb[0].mxu0
  %v204 = vadd.f32 0.0, %v203
  %v205 = vpop.f32.mrb[0].mxu0
  %v206 = vpop.f32.mrb[0].mxu0
  %v207 = vadd.f32 0.0, %v206
  %v208 = vpop.f32.mrb[0].mxu0
  %209 = vmatprep.mubr.bf16.mxu0 0
  %210 = vmatmul.mubr.bf16.gmra.mrb[0].mxu0 %v130
  %v211 = vpop.f32.mrb[0].mxu0
  %v212 = vadd.f32 0.0, %v211
  %v213 = vpop.f32.mrb[0].mxu0
  %v214 = vpop.f32.mrb[0].mxu0
  %v215 = vadd.f32 0.0, %v214
  %v216 = vpop.f32.mrb[0].mxu0
  %217 = vmatprep.mubr.bf16.mxu0 0
  %218 = vmatmul.mubr.bf16.gmra.mrb[0].mxu0 %v133
  %v219 = vpop.f32.mrb[0].mxu0
  %v220 = vadd.f32 0.0, %v219
  %v221 = vpop.f32.mrb[0].mxu0
  %v222 = vpop.f32.mrb[0].mxu0
  %v223 = vadd.f32 0.0, %v222
  %v224 = vpop.f32.mrb[0].mxu0
  %225 = vmatprep.mubr.bf16.mxu0 0
  %226 = vmatmul.mubr.bf16.gmra.mrb[0].mxu0 %v136
  %v227 = vpop.f32.mrb[0].mxu0
  %v228 = vadd.f32 0.0, %v227
  %v229 = vpop.f32.mrb[0].mxu0
  %v230 = vpop.f32.mrb[0].mxu0
  %v231 = vadd.f32 0.0, %v230
  %v232 = vpop.f32.mrb[0].mxu0
  %233 = vmatprep.mubr.bf16.mxu0 0
  %234 = vmatmul.mubr.bf16.gmra.mrb[0].mxu0 %v139
  %v235 = vpop.f32.mrb[0].mxu0
  %v236 = vadd.f32 0.0, %v235
  %v237 = vpop.f32.mrb[0].mxu0
  %v238 = vpop.f32.mrb[0].mxu0
  %v239 = vadd.f32 0.0, %v238
  %v240 = vpop.f32.mrb[0].mxu0
  %241 = vdwg.mxu0
  %vm242 = vcmask 64512
  %v243 = vsel %vm242, %v180, 0.0
  %v244 = vsel %vm242, %v183, 0.0
  %v245 = vadd.f32 %v243, %v244
  %v246 = vsel %vm242, %v188, 0.0
  %v247 = vadd.f32 %v245, %v246
  %v248 = vsel %vm242, %v191, 0.0
  %v249 = vadd.f32 %v247, %v248
  %v250 = vsel %vm242, %v196, 0.0
  %v251 = vadd.f32 %v249, %v250
  %v252 = vsel %vm242, %v199, 0.0
  %v253 = vadd.f32 %v251, %v252
  %v254 = vsel %vm242, %v204, 0.0
  %v255 = vadd.f32 %v253, %v254
  %v256 = vsel %vm242, %v207, 0.0
  %v257 = vadd.f32 %v255, %v256
  %v258 = vsel %vm242, %v212, 0.0
  %v259 = vadd.f32 %v257, %v258
  %v260 = vsel %vm242, %v215, 0.0
  %v261 = vadd.f32 %v259, %v260
  %v262 = vsel %vm242, %v220, 0.0
  %v263 = vadd.f32 %v261, %v262
  %v264 = vsel %vm242, %v223, 0.0
  %v265 = vadd.f32 %v263, %v264
  %v266 = vsel %vm242, %v228, 0.0
  %v267 = vadd.f32 %v265, %v266
  %v268 = vsel %vm242, %v231, 0.0
  %v269 = vadd.f32 %v267, %v268
  %v270 = vsel %vm242, %v236, 0.0
  %v271 = vadd.f32 %v269, %v270
  %v272 = vsel %vm242, %v239, 0.0
  %v273 = vadd.f32 %v271, %v272
  %v274 = vrot.slane %v273, 4
  %v275 = vadd.f32 %v273, %v274
  %v276 = vrot.slane %v275, 2
  %v277 = vadd.f32 %v275, %v276
  %v278 = vrot.slane %v277, 1
  %v279 = vadd.f32 %v277, %v278
  %v280 = vmul.f32 %v180, %v180
  %v281 = vmul.f32 %v183, %v183
  %v282 = vmul.f32 %v188, %v188
  %v283 = vmul.f32 %v191, %v191
  %v284 = vmul.f32 %v196, %v196
  %v285 = vmul.f32 %v199, %v199
  %v286 = vmul.f32 %v204, %v204
  %v287 = vmul.f32 %v207, %v207
  %v288 = vmul.f32 %v212, %v212
  %v289 = vmul.f32 %v215, %v215
  %v290 = vmul.f32 %v220, %v220
  %v291 = vmul.f32 %v223, %v223
  %v292 = vmul.f32 %v228, %v228
  %v293 = vmul.f32 %v231, %v231
  %v294 = vmul.f32 %v236, %v236
  %v295 = vmul.f32 %v239, %v239
  %v296 = vsel %vm242, %v280, 0.0
  %v297 = vsel %vm242, %v281, 0.0
  %v298 = vadd.f32 %v296, %v297
  %v299 = vsel %vm242, %v282, 0.0
  %v300 = vadd.f32 %v298, %v299
  %v301 = vsel %vm242, %v283, 0.0
  %v302 = vadd.f32 %v300, %v301
  %v303 = vsel %vm242, %v284, 0.0
  %v304 = vadd.f32 %v302, %v303
  %v305 = vsel %vm242, %v285, 0.0
  %v306 = vadd.f32 %v304, %v305
  %v307 = vsel %vm242, %v286, 0.0
  %v308 = vadd.f32 %v306, %v307
  %v309 = vsel %vm242, %v287, 0.0
  %v310 = vadd.f32 %v308, %v309
  %v311 = vsel %vm242, %v288, 0.0
  %v312 = vadd.f32 %v310, %v311
  %v313 = vsel %vm242, %v289, 0.0
  %v314 = vadd.f32 %v312, %v313
  %v315 = vsel %vm242, %v290, 0.0
  %v316 = vadd.f32 %v314, %v315
  %v317 = vsel %vm242, %v291, 0.0
  %v318 = vadd.f32 %v316, %v317
  %v319 = vsel %vm242, %v292, 0.0
  %v320 = vadd.f32 %v318, %v319
  %v321 = vsel %vm242, %v293, 0.0
  %v322 = vadd.f32 %v320, %v321
  %v323 = vsel %vm242, %v294, 0.0
  %v324 = vadd.f32 %v322, %v323
  %v325 = vsel %vm242, %v295, 0.0
  %v326 = vadd.f32 %v324, %v325
  %v327 = vrot.slane %v326, 4
  %v328 = vadd.f32 %v326, %v327
  %v329 = vrot.slane %v328, 2
  %v330 = vadd.f32 %v328, %v329
  %v331 = vrot.slane %v330, 1
  %v332 = vadd.f32 %v330, %v331
  %vm333 = vcmask 1040384
  %v334 = vsel %vm333, %v279, %v332
  %v335 = vld [vmem:[%s4] sm:$0x3]
  %v336 = vadd.f32 %v335, %v334
  %vm337 = vcmask 58368
  %338 = vst.msk [vmem:[%s4] sm:$0x3] %vm337, %v336
  // Predicated region
  $region22: #{a_call__.6} parent=0 // pred_check
    %p339 = pneg %p18
  $region23: #{a_call__.6} parent=0 // pred_check_branch
    %341 = sbr.rel (%p339) target = $region25
  $region24: #{a_call__.6} parent=0 // pred_region
    %v342 = vld [vmem:[%s4] sm:$0x3]
    %v343 = vmul.f32 %v342, 0.0078125
    %v344 = vmul.f32 %v343, %v343
    %v346 = vrot.slane %v344, 7
    %v348 = vsub.f32 %v343, %v346
    %v349 = vld [vmem:[%s2] sm:$0x1]
    %v350 = vadd.f32 %v348, 1e-05
    %v351 = vrsqrt.pop %v350
    %v354 = vunpack.c.l.s4 1966171168
    %v355 = vunpack.c.0.s8 %v354
    %v356 = vlaneseq
    %v357 = vshrl.u32 %v356, 7
    %v358 = vsub.s32 %v355, %v357
    %v359 = vrot.slane %v351, %v358
    %v360 = vcombine.high %v359, %v359
    %v362 = vunpack.c.l.s4 1966171168
    %v363 = vunpack.c.0.s8 %v362
    %v364 = vlaneseq
    %v365 = vshrl.u32 %v364, 7
    %v366 = vsub.s32 %v363, %v365
    %v367 = vrot.slane %v360, %v366
    %v369 = vmul.f32 %v349, %v367
    %v370 = vld [vmem:[%s3] sm:$0x1]
    %v371 = vmul.f32 %v343, %v369
    %v372 = vsub.f32 %v370, %v371
    %v374 = vlaneseq
    %v375 = vshrl.u32 %v374, 7
    %v376 = vsub.s32 0, %v375
    %v377 = vrot.slane %v372, %v376
    %v379 = vsel %vm333, %v369, %v377
    %380 = vst.msk [vmem:[%s4] sm:$0x3] %vm337, %v379
  $region25: #{a_call__.6} parent=0 // pred_fallthru
    _
  // Predicated region
  $region26: #{a_call__.6} parent=0 // pred_check
    _
  $region27: #{a_call__.6} parent=0 // pred_check_branch
    %382 = sbr.rel (0) target = $region29
  $region28: #{a_call__.6} parent=0 // pred_region
    _
  $region29: #{a_call__.6} parent=0 // pred_fallthru
    _
  // Predicated region
  $region30: #{a_call__.6} parent=0 // pred_check
    _
  $region31: #{a_call__.6} parent=0 // pred_check_branch
    %384 = sbr.rel (0) target = $region33
  $region32: #{a_call__.6} parent=0 // pred_region
    _
  $region33: #{a_call__.6} parent=0 // pred_fallthru
    _

</llo_original>
